<compile_context>
chip_gen: v7x
topology: tpu7x:2x2x1
jax: 0.10.0
libtpu: 0.0.40
codegen_flags: <defaults>
</compile_context>

<pallas_src>
import jax
import jax.numpy as jnp
from jax import lax
from jax.experimental import pallas as pl
from jax.experimental.pallas import tpu as pltpu

EPS = 1e-5  # nn.BatchNorm2d default


# ----------------------------------------------------------------------------
# Kernel 1: conv-as-GEMM (sub-pixel 2x2 form, bf16x3 split, f32 accumulation)
# fused with masked per-tile BN statistics (sum / sum-of-squares per column).
# ----------------------------------------------------------------------------
def conv_gemm_kernel(x_ref, w_hi_ref, w_lo_ref, mt_ref, y_ref, stat_ref):
    x = x_ref[...]                                       # (tm, K) f32
    x_hi = x.astype(jnp.bfloat16)
    x_lo = (x - x_hi.astype(jnp.float32)).astype(jnp.bfloat16)

    # 3 bf16 MXU passes ~= lax.Precision.HIGH (vs 6 passes for HIGHEST).
    y = jnp.dot(x_hi, w_hi_ref[...], preferred_element_type=jnp.float32)
    y = y + jnp.dot(x_lo, w_hi_ref[...], preferred_element_type=jnp.float32)
    y = y + jnp.dot(x_hi, w_lo_ref[...], preferred_element_type=jnp.float32)
    y_ref[...] = y

    # Partial BN statistics over *valid* rows only: mask rows are 0/1
    # indicators per sub-pixel group, so mask @ y and mask @ y^2 are the
    # masked column sums (one small matmul each, riding the MXU).
    mt = mt_ref[...]                                     # (8, tm), rows 4..7 = 0
    stat_ref[0:8, :] = jnp.dot(mt, y, preferred_element_type=jnp.float32)
    stat_ref[8:16, :] = jnp.dot(mt, y * y, preferred_element_type=jnp.float32)


# ----------------------------------------------------------------------------
# Kernel 2: elementwise batch-norm (precomputed per-column scale/shift) + ReLU.
# ----------------------------------------------------------------------------
def bn_relu_kernel(y_ref, scale_ref, shift_ref, o_ref):
    o_ref[...] = jnp.maximum(y_ref[...] * scale_ref[...] + shift_ref[...], 0.0)


def up_conv_forward(x, w, b, gamma, beta, *, tm=512):
    """x: [N, Cin, H, W] f32, w: [Cout, Cin, 3, 3].  Returns [N, Cout, 2H, 2W]."""
    del b  # exact: training-mode BN subtracts the batch mean -> bias cancels
    f32 = jnp.float32
    N, Cin, H, W = x.shape
    Cout = w.shape[0]
    K = 4 * Cin                        # 2x2 taps per input channel
    Ncols = 4 * Cout                   # 4 output sub-pixels per channel
    Npad = pl.cdiv(Ncols, 128) * 128   # lane-dense, unmasked stores
    tm = max(8, (tm // 8) * 8)

    x = x.astype(f32)
    w = w.astype(f32)

    # --- glue: fold the 3x3 kernel into four 2x2 sub-pixel kernels (tiny) ----
    # A[u, dr, kh]: which original 3x3 rows feed tap dr of sub-pixel row u.
    A = jnp.array([[[1., 1., 0.], [0., 0., 1.]],        # u=0 -> output row 2R-1
                   [[1., 0., 0.], [0., 1., 1.]]], f32)  # u=1 -> output row 2R
    w_all = jnp.einsum('uik,vjl,ockl->cijuvo', A, A, w).reshape(K, Ncols)
    w_all = jnp.pad(w_all, ((0, 0), (0, Npad - Ncols)))
    w_hi = w_all.astype(jnp.bfloat16)
    w_lo = (w_all - w_hi.astype(f32)).astype(jnp.bfloat16)

    # --- glue: 2x2-window im2col of x (a ~4x slab, vs the old 36x slab) ------
    # Window top-left (R, T) on the 1-padded input covers x rows {R-1, R} and
    # cols {T-1, T} and produces the 2x2 output block at rows {2R-1, 2R},
    # cols {2T-1, 2T}, with R in [0, H], T in [0, W].
    x_pad = jnp.pad(x.transpose(0, 2, 3, 1), ((0, 0), (1, 1), (1, 1), (0, 0)))
    taps = jnp.stack([x_pad[:, dr:dr + H + 1, dc:dc + W + 1, :]
                      for dr in (0, 1) for dc in (0, 1)], axis=-1)
    M2 = N * (H + 1) * (W + 1)
    x_col = taps.reshape(M2, K)

    # Validity mask: border windows emit a few out-of-range sub-pixel outputs
    # (output row -1 / 2H, col -1 / 2W); exclude them from the BN statistics.
    r = jnp.arange(H + 1)
    t = jnp.arange(W + 1)
    vr = jnp.stack([r >= 1, r <= H - 1], axis=-1)        # (H+1, 2)  u = 0, 1
    vt = jnp.stack([t >= 1, t <= W - 1], axis=-1)        # (W+1, 2)  v = 0, 1
    mask = vr[:, None, :, None] & vt[None, :, None, :]   # (H+1, W+1, 2, 2)
    mask = jnp.broadcast_to(mask[None], (N, H + 1, W + 1, 2, 2))
    mask = mask.reshape(M2, 4).astype(f32)

    # Pad the GEMM row dim to a multiple of the row tile (any shape works).
    Mp = pl.cdiv(M2, tm) * tm
    x_col = jnp.pad(x_col, ((0, Mp - M2), (0, 0)))
    mask_t = jnp.pad(mask, ((0, Mp - M2), (0, 4))).T      # (8, Mp), rows 4..7 = 0
    grid = (Mp // tm,)

    y_all, stats = pl.pallas_call(
        conv_gemm_kernel,
        out_shape=(jax.ShapeDtypeStruct((Mp, Npad), f32),
                   jax.ShapeDtypeStruct((grid[0] * 16, Npad), f32)),
        grid_spec=pltpu.PrefetchScalarGridSpec(
            num_scalar_prefetch=0,
            grid=grid,
            in_specs=[pl.BlockSpec((tm, K), lambda i: (i, 0)),
                      pl.BlockSpec((K, Npad), lambda i: (0, 0)),
                      pl.BlockSpec((K, Npad), lambda i: (0, 0)),
                      pl.BlockSpec((8, tm), lambda i: (0, i))],
            out_specs=[pl.BlockSpec((tm, Npad), lambda i: (i, 0)),
                       pl.BlockSpec((16, Npad), lambda i: (i, 0))]),
        compiler_params=pltpu.CompilerParams(
            dimension_semantics=("parallel",)),  # per-tile stats -> megacore OK
    )(x_col, w_hi, w_lo, mask_t)

    # --- glue: fold partial stats into BN scale/shift (training mode) --------
    st = stats.reshape(grid[0], 16, Npad).sum(axis=0)
    S = st[0:4, :Ncols].reshape(4, 4, Cout)      # [mask group, column group, o]
    Q = st[8:12, :Ncols].reshape(4, 4, Cout)
    g = jnp.arange(4)
    s_pc = S[g, g].sum(axis=0)                   # valid sum per channel
    q_pc = Q[g, g].sum(axis=0)                   # valid sum of squares
    count = jnp.float32(4 * N * H * W)
    mean = s_pc / count
    var = jnp.maximum(q_pc / count - mean * mean, 0.0)  # guard tiny negatives
    inv_std = lax.rsqrt(var + EPS)
    scale = gamma.astype(f32) * inv_std
    shift = beta.astype(f32) - mean * scale

    def per_column(v):  # broadcast per-channel vector over the (s, o) columns
        return jnp.pad(jnp.tile(v, 4), (0, Npad - Ncols)).reshape(1, Npad)

    out_flat = pl.pallas_call(
        bn_relu_kernel,
        out_shape=jax.ShapeDtypeStruct((Mp, Npad), f32),
        grid_spec=pltpu.PrefetchScalarGridSpec(
            num_scalar_prefetch=0,
            grid=grid,
            in_specs=[pl.BlockSpec((tm, Npad), lambda i: (i, 0)),
                      pl.BlockSpec((1, Npad), lambda i: (0, 0)),
                      pl.BlockSpec((1, Npad), lambda i: (0, 0))],
            out_specs=pl.BlockSpec((tm, Npad), lambda i: (i, 0))),
        compiler_params=pltpu.CompilerParams(
            dimension_semantics=("parallel",)),
    )(y_all, per_column(scale), per_column(shift))

    # --- glue: sub-pixel interleave + NCHW (single fused XLA pass) -----------
    # TODO(synk): the stride-2 sub-pixel scatter is not expressible as a
    # lane-dense Pallas out_spec, so this final interleave/transpose is left
    # to one fused XLA pass over the output tensor.
    yv = out_flat[:M2, :Ncols].reshape(N, H + 1, W + 1, 2, 2, Cout)
    out = yv.transpose(0, 5, 1, 3, 2, 4).reshape(
        N, Cout, 2 * (H + 1), 2 * (W + 1))
    return out[:, :, 1:2 * H + 1, 1:2 * W + 1]


def reference_forward(x, w, b, gamma, beta):
    """Pure-JAX reference mirroring PyTorch semantics."""
    x_up = jnp.repeat(jnp.repeat(x, 2, axis=2), 2, axis=3)
    y = lax.conv_general_dilated(
        x_up, w, window_strides=(1, 1), padding="SAME",
        dimension_numbers=("NCHW", "OIHW", "NCHW"),
        precision=lax.Precision.HIGHEST) + b[None, :, None, None]
    mean = y.mean(axis=(0, 2, 3), keepdims=True)
    var = y.var(axis=(0, 2, 3), keepdims=True)       # biased, like BN training
    y_hat = (y - mean) * lax.rsqrt(var + EPS)
    y_hat = y_hat * gamma[None, :, None, None] + beta[None, :, None, None]
    return jnp.maximum(y_hat, 0.0)


if __name__ == "__main__":
    N, Cin, Cout, H, W = 2, 4, 8, 16, 16
    key = jax.random.PRNGKey(0)
    kx, kw, kb, kg, kbe = jax.random.split(key, 5)

    x = jax.random.normal(kx, (N, Cin, H, W), dtype=jnp.float32)
    bound = 1.0 / (Cin * 9) ** 0.5
    w = jax.random.uniform(kw, (Cout, Cin, 3, 3), jnp.float32, -bound, bound)
    b = jax.random.uniform(kb, (Cout,), jnp.float32, -bound, bound)
    gamma = jax.random.uniform(kg, (Cout,), jnp.float32, 0.5, 1.5)
    beta = 0.1 * jax.random.normal(kbe, (Cout,), dtype=jnp.float32)

    fwd = jax.jit(up_conv_forward)
    out = jax.block_until_ready(fwd(x, w, b, gamma, beta))

    ref = reference_forward(x, w, b, gamma, beta)
    assert out.shape == (N, Cout, 2 * H, 2 * W), out.shape
    max_err = float(jnp.max(jnp.abs(out - ref)))
    assert jnp.allclose(out, ref, rtol=1e-3, atol=1e-3), max_err

    print("KERNEL_OK")
</pallas_src>

<mosaic_0001>
module attributes {stable_mosaic.version = 11 : i64} {
  func.func @conv_gemm_kernel(%arg0: i32, %arg1: memref<512x16xf32, #tpu.memory_space<vmem>>, %arg2: memref<16x128xbf16, #tpu.memory_space<vmem>>, %arg3: memref<16x128xbf16, #tpu.memory_space<vmem>>, %arg4: memref<8x512xf32, #tpu.memory_space<vmem>>, %arg5: memref<512x128xf32, #tpu.memory_space<vmem>>, %arg6: memref<16x128xf32, #tpu.memory_space<vmem>>) attributes {dimension_semantics = [#tpu.dimension_semantics<parallel>], iteration_bounds = array<i64: 2>, scalar_prefetch = 0 : i64, scratch_operands = 0 : i64, tpu.core_type = #tpu.core_type<tc>, window_params = [{transform_indices = @transform_0, window_bounds = array<i64: 512, 16>}, {pipeline_mode = #tpu.pipeline_mode<synchronous>, transform_indices = @transform_1, window_bounds = array<i64: 16, 128>}, {pipeline_mode = #tpu.pipeline_mode<synchronous>, transform_indices = @transform_2, window_bounds = array<i64: 16, 128>}, {transform_indices = @transform_3, window_bounds = array<i64: 8, 512>}, {transform_indices = @transform_4, window_bounds = array<i64: 512, 128>}, {transform_indices = @transform_5, window_bounds = array<i64: 16, 128>}]} {
    %c0 = arith.constant 0 : index
    %c0_0 = arith.constant 0 : index
    %0 = vector.load %arg1[%c0, %c0_0] : memref<512x16xf32, #tpu.memory_space<vmem>>, vector<512x16xf32>
    %1 = arith.truncf %0 : vector<512x16xf32> to vector<512x16xbf16>
    %2 = arith.extf %1 : vector<512x16xbf16> to vector<512x16xf32>
    %3 = arith.subf %0, %2 : vector<512x16xf32>
    %4 = arith.truncf %3 : vector<512x16xf32> to vector<512x16xbf16>
    %c0_1 = arith.constant 0 : index
    %c0_2 = arith.constant 0 : index
    %5 = vector.load %arg2[%c0_1, %c0_2] : memref<16x128xbf16, #tpu.memory_space<vmem>>, vector<16x128xbf16>
    %cst = arith.constant dense<0.000000e+00> : vector<512x128xf32>
    %6 = tpu.matmul %1, %5, %cst {dimension_numbers = #tpu.dot_dimension_numbers<[1], [0], [0], [1], [0, 0, 1, 1], [], []>} : vector<512x16xbf16>, vector<16x128xbf16>, vector<512x128xf32> -> vector<512x128xf32>
    %c0_3 = arith.constant 0 : index
    %c0_4 = arith.constant 0 : index
    %7 = vector.load %arg2[%c0_3, %c0_4] : memref<16x128xbf16, #tpu.memory_space<vmem>>, vector<16x128xbf16>
    %cst_5 = arith.constant dense<0.000000e+00> : vector<512x128xf32>
    %8 = tpu.matmul %4, %7, %cst_5 {dimension_numbers = #tpu.dot_dimension_numbers<[1], [0], [0], [1], [0, 0, 1, 1], [], []>} : vector<512x16xbf16>, vector<16x128xbf16>, vector<512x128xf32> -> vector<512x128xf32>
    %9 = arith.addf %6, %8 : vector<512x128xf32>
    %c0_6 = arith.constant 0 : index
    %c0_7 = arith.constant 0 : index
    %10 = vector.load %arg3[%c0_6, %c0_7] : memref<16x128xbf16, #tpu.memory_space<vmem>>, vector<16x128xbf16>
    %cst_8 = arith.constant dense<0.000000e+00> : vector<512x128xf32>
    %11 = tpu.matmul %1, %10, %cst_8 {dimension_numbers = #tpu.dot_dimension_numbers<[1], [0], [0], [1], [0, 0, 1, 1], [], []>} : vector<512x16xbf16>, vector<16x128xbf16>, vector<512x128xf32> -> vector<512x128xf32>
    %12 = arith.addf %9, %11 : vector<512x128xf32>
    %c0_9 = arith.constant 0 : index
    %c0_10 = arith.constant 0 : index
    %13 = vector.load %arg5[%c0_9, %c0_10] : memref<512x128xf32, #tpu.memory_space<vmem>>, vector<512x128xf32>
    tpu.vector_store %arg5[%c0_9, %c0_10], %12 {strides = array<i32>} : memref<512x128xf32, #tpu.memory_space<vmem>>, vector<512x128xf32>,
    %c0_11 = arith.constant 0 : index
    %c0_12 = arith.constant 0 : index
    %14 = vector.load %arg4[%c0_11, %c0_12] : memref<8x512xf32, #tpu.memory_space<vmem>>, vector<8x512xf32>
    %cst_13 = arith.constant dense<0.000000e+00> : vector<8x128xf32>
    %15 = tpu.matmul %14, %12, %cst_13 {dimension_numbers = #tpu.dot_dimension_numbers<[1], [0], [0], [1], [0, 0, 1, 1], [], []>} : vector<8x512xf32>, vector<512x128xf32>, vector<8x128xf32> -> vector<8x128xf32>
    %c0_14 = arith.constant 0 : index
    %c0_15 = arith.constant 0 : index
    %16 = vector.load %arg6[%c0_14, %c0_15] : memref<16x128xf32, #tpu.memory_space<vmem>>, vector<8x128xf32>
    tpu.vector_store %arg6[%c0_14, %c0_15], %15 {strides = array<i32>} : memref<16x128xf32, #tpu.memory_space<vmem>>, vector<8x128xf32>,
    %17 = arith.mulf %12, %12 : vector<512x128xf32>
    %cst_16 = arith.constant dense<0.000000e+00> : vector<8x128xf32>
    %18 = tpu.matmul %14, %17, %cst_16 {dimension_numbers = #tpu.dot_dimension_numbers<[1], [0], [0], [1], [0, 0, 1, 1], [], []>} : vector<8x512xf32>, vector<512x128xf32>, vector<8x128xf32> -> vector<8x128xf32>
    %c8 = arith.constant 8 : index
    %c0_17 = arith.constant 0 : index
    %19 = vector.load %arg6[%c8, %c0_17] : memref<16x128xf32, #tpu.memory_space<vmem>>, vector<8x128xf32>
    tpu.vector_store %arg6[%c8, %c0_17], %18 {strides = array<i32>} : memref<16x128xf32, #tpu.memory_space<vmem>>, vector<8x128xf32>,
    return
  }
  func.func @transform_0(%arg0: i32) -> (i32, i32) {
    %c0_i32 = arith.constant 0 : i32
    %c0_i32_0 = arith.constant 0 : i32
    return %arg0, %c0_i32 : i32, i32
  }
  func.func @transform_1(%arg0: i32) -> (i32, i32) {
    %c0_i32 = arith.constant 0 : i32
    %c0_i32_0 = arith.constant 0 : i32
    %c0_i32_1 = arith.constant 0 : i32
    return %c0_i32, %c0_i32_0 : i32, i32
  }
  func.func @transform_2(%arg0: i32) -> (i32, i32) {
    %c0_i32 = arith.constant 0 : i32
    %c0_i32_0 = arith.constant 0 : i32
    %c0_i32_1 = arith.constant 0 : i32
    return %c0_i32, %c0_i32_0 : i32, i32
  }
  func.func @transform_3(%arg0: i32) -> (i32, i32) {
    %c0_i32 = arith.constant 0 : i32
    %c0_i32_0 = arith.constant 0 : i32
    return %c0_i32, %arg0 : i32, i32
  }
  func.func @transform_4(%arg0: i32) -> (i32, i32) {
    %c0_i32 = arith.constant 0 : i32
    %c0_i32_0 = arith.constant 0 : i32
    return %arg0, %c0_i32 : i32, i32
  }
  func.func @transform_5(%arg0: i32) -> (i32, i32) {
    %c0_i32 = arith.constant 0 : i32
    %c0_i32_0 = arith.constant 0 : i32
    return %arg0, %c0_i32 : i32, i32
  }
}

module attributes {stable_mosaic.version = 11 : i64} {
  func.func @bn_relu_kernel(%arg0: i32, %arg1: memref<512x128xf32, #tpu.memory_space<vmem>>, %arg2: memref<1x128xf32, #tpu.memory_space<vmem>>, %arg3: memref<1x128xf32, #tpu.memory_space<vmem>>, %arg4: memref<512x128xf32, #tpu.memory_space<vmem>>) attributes {dimension_semantics = [#tpu.dimension_semantics<parallel>], iteration_bounds = array<i64: 2>, scalar_prefetch = 0 : i64, scratch_operands = 0 : i64, tpu.core_type = #tpu.core_type<tc>, window_params = [{transform_indices = @transform_0, window_bounds = array<i64: 512, 128>}, {pipeline_mode = #tpu.pipeline_mode<synchronous>, transform_indices = @transform_1, window_bounds = array<i64: 1, 128>}, {pipeline_mode = #tpu.pipeline_mode<synchronous>, transform_indices = @transform_2, window_bounds = array<i64: 1, 128>}, {transform_indices = @transform_3, window_bounds = array<i64: 512, 128>}]} {
    %c0 = arith.constant 0 : index
    %c0_0 = arith.constant 0 : index
    %0 = vector.load %arg1[%c0, %c0_0] : memref<512x128xf32, #tpu.memory_space<vmem>>, vector<512x128xf32>
    %c0_1 = arith.constant 0 : index
    %c0_2 = arith.constant 0 : index
    %1 = vector.load %arg2[%c0_1, %c0_2] : memref<1x128xf32, #tpu.memory_space<vmem>>, vector<1x128xf32>
    %2 = vector.broadcast %1 : vector<1x128xf32> to vector<512x128xf32>
    %3 = arith.mulf %0, %2 : vector<512x128xf32>
    %c0_3 = arith.constant 0 : index
    %c0_4 = arith.constant 0 : index
    %4 = vector.load %arg3[%c0_3, %c0_4] : memref<1x128xf32, #tpu.memory_space<vmem>>, vector<1x128xf32>
    %5 = vector.broadcast %4 : vector<1x128xf32> to vector<512x128xf32>
    %6 = arith.addf %3, %5 : vector<512x128xf32>
    %cst = arith.constant 0.000000e+00 : f32
    %7 = vector.broadcast %cst : f32 to vector<512x128xf32>
    %8 = arith.maximumf %6, %7 : vector<512x128xf32>
    %c0_5 = arith.constant 0 : index
    %c0_6 = arith.constant 0 : index
    %9 = vector.load %arg4[%c0_5, %c0_6] : memref<512x128xf32, #tpu.memory_space<vmem>>, vector<512x128xf32>
    tpu.vector_store %arg4[%c0_5, %c0_6], %8 {strides = array<i32>} : memref<512x128xf32, #tpu.memory_space<vmem>>, vector<512x128xf32>,
    return
  }
  func.func @transform_0(%arg0: i32) -> (i32, i32) {
    %c0_i32 = arith.constant 0 : i32
    %c0_i32_0 = arith.constant 0 : i32
    return %arg0, %c0_i32 : i32, i32
  }
  func.func @transform_1(%arg0: i32) -> (i32, i32) {
    %c0_i32 = arith.constant 0 : i32
    %c0_i32_0 = arith.constant 0 : i32
    %c0_i32_1 = arith.constant 0 : i32
    return %c0_i32, %c0_i32_0 : i32, i32
  }
  func.func @transform_2(%arg0: i32) -> (i32, i32) {
    %c0_i32 = arith.constant 0 : i32
    %c0_i32_0 = arith.constant 0 : i32
    %c0_i32_1 = arith.constant 0 : i32
    return %c0_i32, %c0_i32_0 : i32, i32
  }
  func.func @transform_3(%arg0: i32) -> (i32, i32) {
    %c0_i32 = arith.constant 0 : i32
    %c0_i32_0 = arith.constant 0 : i32
    return %arg0, %c0_i32 : i32, i32
  }
}

</mosaic_0001>

<llo_original>
// kernel: tile.18
$region0: #{tile.18}
  #allocation0 [shape = 's32[1]{0}', space=sflag, size = 0x4, scoped, tag = 'scoped memory for tile.18']
  %s0 = inlined_call_operand.vmem [shape: f32[8], index: 0, kind: input, shape index: {}]
  %s1 = inlined_call_operand.vmem [shape: f32[4,8], index: 1, kind: output, shape index: {}]
  // Predicated region
  $region2: #{tile.18} parent=0 // pred_check
    _
  $region3: #{tile.18} parent=0 // pred_check_branch
    %3 = sbr.rel (0) target = $region5
  $region4: #{tile.18} parent=0 // pred_region
    _
  $region5: #{tile.18} parent=0 // pred_fallthru
    _
  %v4 = vld [vmem:[%s0] ss:$0 sm:$0xff]
  %5 = vst [vmem:[%s1] sm:$0xf] %v4

// kernel: tile.19
$region0: #{tile.19}
  %s0 = inlined_call_operand.vmem [shape: f32[4,8], index: 0, kind: input, shape index: {}]
  %s1 = inlined_call_operand.vmem [shape: f32[32], index: 1, kind: output, shape index: {}]
  $region1: #{tile.19} parent=0
    #allocation0 [shape = 'u8[4096]{0}', space=vmem, size = 0x1000, scoped, tag = 'scoped mem for output reshape']
    #allocation1 [shape = 'u8[4096]{0}', space=vmem, size = 0x1000, scoped, tag = 'scoped mem for input reshape']
    %s3 = sshllo.u32 0, 4
    %v4 = vld [vmem:[%s0] sm:%s3]
    %5 = vst [vmem:[#allocation1] sm:%s3] %v4
    %v6 = vld [vmem:[#allocation1] sm:$0x1]
    %vm7 = vcmask 64512
    %8 = vst.msk [vmem:[#allocation0] sm:$0x1] %vm7, %v6
    %s9 = scalar_lea.vmem [#allocation1], 3
    %v10 = vld [vmem:[%s9] sm:$0x1]
    %11 = vrot.lane.b32.xlu0 %v10, 24
    %v12 = vpop.permute.xlu0 %11
    %vm13 = vcmask 261312
    %14 = vst.msk [vmem:[#allocation0] sm:$0x1] %vm13, %v12
    %s15 = scalar_lea.vmem [#allocation1], 2
    %v16 = vld [vmem:[%s15] sm:$0x1]
    %17 = vrot.lane.b32.xlu0 %v16, 16
    %v18 = vpop.permute.xlu0 %17
    %vm19 = vcmask 195712
    %20 = vst.msk [vmem:[#allocation0] sm:$0x1] %vm19, %v18
    %s21 = scalar_lea.vmem [#allocation1], 1
    %v22 = vld [vmem:[%s21] sm:$0x1]
    %23 = vrot.lane.b32.xlu0 %v22, 8
    %v24 = vpop.permute.xlu0 %23
    %vm25 = vcmask 130112
    %26 = vst.msk [vmem:[#allocation0] sm:$0x1] %vm25, %v24
    %s28 = sshllo.u32 0, 1
    %v30 = vld [vmem:[#allocation0] sm:%s28]
    %s31 = sshllo.u32 0, 1
    %32 = vst [vmem:[%s1] sm:%s31] %v30

// kernel: up_conv_forward.3
$region0: #{up_conv_forward.3}
  #allocation0 [shape = 'u32[]', space=smem, size = 0x4, offset = 0x4, fixed_abs, tag = 'smem constant byte address 0x4 - core index']
  #allocation1 [shape = 'u32[144,128]{1,0:T(1,128)}', space=vmem, size = 0x12000, scoped, tag = 'internal scratch']
  %s0 = inlined_call_operand.vmem [shape: f32[1024,128], index: 0, kind: input, shape index: {}]
  %s1 = inlined_call_operand.vmem [shape: f32[1,128], index: 1, kind: input, shape index: {}]
  %s2 = inlined_call_operand.vmem [shape: f32[1,128], index: 2, kind: input, shape index: {}]
  %s3 = inlined_call_operand.vmem [shape: f32[1024,128], index: 3, kind: output, shape index: {}]
  %s4 = sld [smem:[#allocation0]]
  $region45: #{up_conv_forward.3} parent=0
    _
  %s6 = ssub.s32 1, %s4
  %s7 = scalar_select 0, %s6, %s4
  loop: start=0, step=1, limit=4
  $region2: #{up_conv_forward.3} parent=0 // loop_pre_header
    _
  $region3: #{up_conv_forward.3} parent=0 // loop_header
    %s9 = sphi 0, %s13
    %p10 = scmp.ge.s32.totalorder %s9, 4
    %s19 = sphi 0, %s21
    %s22 = sphi 0, %s19
    %s23 = sphi 0, %s22
    %s39 = sphi 0, %s23
    %s43 = sphi 0, %s43
    %s45 = sphi 0, %s43
    %s46 = sphi 0, %s45
    %s60 = sphi 0, %s46
    %s64 = sphi 0, %s64
    %s66 = sphi 0, %s64
    %s67 = sphi 0, %s66
    %s81 = sphi 0, %s67
    %s87 = sphi 0, %s89
    %s90 = sphi 0, %s87
    %s91 = sphi 0, %s90
    %s107 = sphi 0, %s91
  $region4: #{up_conv_forward.3} parent=0 // loop_header_branch
    %12 = sbr.rel (%p10) target = $region8
  $region5: #{up_conv_forward.3} parent=0 // loop_body
    %s14 = ssub.s32 %s9, 1
    %s15 = ssub.s32 %s9, 2
    %s16 = sadd.s32 %s9, 1
    %s17 = ssub.s32 %s9, %s16
    %p18 = scmp.eq.s32.totalorder %s17, 0
    %s20 = sadd.s32 %s19, 1
    %s21 = scalar_select %p18, %s19, %s20
    %p24 = pneg %p18
    %p25 = scmp.eq.s32.totalorder %s9, 1
    %p26 = por %p24, %p25
    %p27 = scmp.ne.s32.totalorder %s19, %s22
    %p28 = scmp.eq.s32.totalorder %s9, 0
    %p29 = por %p27, %p28
    %p30 = scmp.ne.s32.totalorder %s19, %s22
    %p31 = scmp.eq.s32.totalorder %s14, 1
    %p32 = por %p30, %p31
    %p33 = scmp.ne.s32.totalorder %s22, %s23
    %p34 = scmp.eq.s32.totalorder %s14, 0
    %p35 = por %p33, %p34
    %p36 = scmp.ne.s32.totalorder %s22, %s23
    %p37 = scmp.eq.s32.totalorder %s15, 1
    %p38 = por %p36, %p37
    %p40 = scmp.ne.s32.totalorder %s23, %s39
    %p41 = scmp.eq.s32.totalorder %s15, 0
    %p42 = por %p40, %p41
    %s44 = sadd.s32 %s43, 1
    %p47 = scmp.eq.s32.totalorder %s9, 1
    %p48 = scmp.ne.s32.totalorder %s43, %s45
    %p49 = scmp.eq.s32.totalorder %s9, 0
    %p50 = por %p48, %p49
    %p51 = scmp.ne.s32.totalorder %s43, %s45
    %p52 = scmp.eq.s32.totalorder %s14, 1
    %p53 = por %p51, %p52
    %p54 = scmp.ne.s32.totalorder %s45, %s46
    %p55 = scmp.eq.s32.totalorder %s14, 0
    %p56 = por %p54, %p55
    %p57 = scmp.ne.s32.totalorder %s45, %s46
    %p58 = scmp.eq.s32.totalorder %s15, 1
    %p59 = por %p57, %p58
    %p61 = scmp.ne.s32.totalorder %s46, %s60
    %p62 = scmp.eq.s32.totalorder %s15, 0
    %p63 = por %p61, %p62
    %s65 = sadd.s32 %s64, 1
    %p68 = scmp.eq.s32.totalorder %s9, 1
    %p69 = scmp.ne.s32.totalorder %s64, %s66
    %p70 = scmp.eq.s32.totalorder %s9, 0
    %p71 = por %p69, %p70
    %p72 = scmp.ne.s32.totalorder %s64, %s66
    %p73 = scmp.eq.s32.totalorder %s14, 1
    %p74 = por %p72, %p73
    %p75 = scmp.ne.s32.totalorder %s66, %s67
    %p76 = scmp.eq.s32.totalorder %s14, 0
    %p77 = por %p75, %p76
    %p78 = scmp.ne.s32.totalorder %s66, %s67
    %p79 = scmp.eq.s32.totalorder %s15, 1
    %p80 = por %p78, %p79
    %p82 = scmp.ne.s32.totalorder %s67, %s81
    %p83 = scmp.eq.s32.totalorder %s15, 0
    %p84 = por %p82, %p83
    %s85 = ssub.s32 %s9, %s16
    %p86 = scmp.eq.s32.totalorder %s85, 0
    %s88 = sadd.s32 %s87, 1
    %s89 = scalar_select %p86, %s87, %s88
    %p92 = pneg %p86
    %p93 = scmp.eq.s32.totalorder %s9, 1
    %p94 = por %p92, %p93
    %p95 = scmp.ne.s32.totalorder %s87, %s90
    %p96 = scmp.eq.s32.totalorder %s9, 0
    %p97 = por %p95, %p96
    %p98 = scmp.ne.s32.totalorder %s87, %s90
    %p99 = scmp.eq.s32.totalorder %s14, 1
    %p100 = por %p98, %p99
    %p101 = scmp.ne.s32.totalorder %s90, %s91
    %p102 = scmp.eq.s32.totalorder %s14, 0
    %p103 = por %p101, %p102
    %p104 = scmp.ne.s32.totalorder %s90, %s91
    %p105 = scmp.eq.s32.totalorder %s15, 1
    %p106 = por %p104, %p105
    %p108 = scmp.ne.s32.totalorder %s91, %s107
    %p109 = scmp.eq.s32.totalorder %s15, 0
    %p110 = por %p108, %p109
    %p111 = scmp.le.s32.totalorder 1, %s9
    %p112 = scmp.lt.s32.totalorder %s9, 3
    %p113 = pnand %p111, %p112
    %p114 = pneg %p113
    // Predicated region
    $region9: #{up_conv_forward.3} parent=5 // pred_check
      _
    $region10: #{up_conv_forward.3} parent=5 // pred_check_branch
      %116 = sbr.rel (%p113) target = $region12
    $region11: #{up_conv_forward.3} parent=5 // pred_region
      %s117 = ssub.s32 %s9, 1
      // Predicated region
      $region13: #{up_conv_forward.3} parent=11 // pred_check
        %p118 = pneg %p56
      $region14: #{up_conv_forward.3} parent=11 // pred_check_branch
        %120 = sbr.rel (%p118) target = $region16
      $region15: #{up_conv_forward.3} parent=11 // pred_region
        _
      $region16: #{up_conv_forward.3} parent=11 // pred_fallthru
        _
      // Predicated region
      $region17: #{up_conv_forward.3} parent=11 // pred_check
        %p121 = pneg %p77
      $region18: #{up_conv_forward.3} parent=11 // pred_check_branch
        %123 = sbr.rel (%p121) target = $region20
      $region19: #{up_conv_forward.3} parent=11 // pred_region
        _
      $region20: #{up_conv_forward.3} parent=11 // pred_fallthru
        _
    $region12: #{up_conv_forward.3} parent=5 // pred_fallthru
      _
    %p124 = scmp.lt.s32.totalorder %s9, 2
    // Predicated region
    $region21: #{up_conv_forward.3} parent=5 // pred_check
      %p125 = pneg %p124
    $region22: #{up_conv_forward.3} parent=5 // pred_check_branch
      %127 = sbr.rel (%p125) target = $region24
    $region23: #{up_conv_forward.3} parent=5 // pred_region
      // Predicated region
      $region25: #{up_conv_forward.3} parent=23 // pred_check
        %p128 = pneg %p29
      $region26: #{up_conv_forward.3} parent=23 // pred_check_branch
        %130 = sbr.rel (%p128) target = $region28
      $region27: #{up_conv_forward.3} parent=23 // pred_region
        %s131 = smul.u32 64, %s9
        %p132 = scmp.lt.s32.totalorder %s131, 127
        %s133 = scalar_select %p132, %s131, 127
        %s134 = smul.addr %s133, 8
        %s135 = scalar_lea.vmem %s0, %s134
        %s136 = smul.u32 64, %s9
      $region28: #{up_conv_forward.3} parent=23 // pred_fallthru
        _
    $region24: #{up_conv_forward.3} parent=5 // pred_fallthru
      _
    %p137 = scmp.le.s32.totalorder 1, %s9
    %p138 = scmp.lt.s32.totalorder %s9, 3
    %p139 = pnand %p137, %p138
    %p140 = pneg %p139
    // Predicated region
    $region29: #{up_conv_forward.3} parent=5 // pred_check
      _
    $region30: #{up_conv_forward.3} parent=5 // pred_check_branch
      %142 = sbr.rel (%p139) target = $region32
    $region31: #{up_conv_forward.3} parent=5 // pred_region
      %s143 = ssub.s32 %s9, 1
      %s144 = smul.u32 64, %s14
      %p145 = scmp.lt.s32.totalorder %s144, 127
      %s146 = scalar_select %p145, %s144, 127
      %s147 = smul.addr %s146, 8
      %s148 = scalar_lea.vmem %s0, %s147
      %p149 = pneg %p35
      %p150 = pneg %p32
      %p151 = pneg %p56
      %p152 = pneg %p53
      %p153 = pneg %p77
      %p154 = pneg %p74
      %p155 = pneg %p103
      %p156 = pneg %p100
      %s157 = smul.u32 64, %s14
      %p158 = scmp.lt.s32.totalorder %s157, 127
      %s159 = scalar_select %p158, %s157, 127
      %s160 = smul.addr %s159, 8
      %s161 = scalar_lea.vmem %s3, %s160
      %s162 = smul.u32 64, %s14
      %p163 = scmp.lt.s32.totalorder %s162, 127
      %s164 = scalar_select %p163, %s162, 127
      %s165 = smul.addr %s164, 8
      %s166 = scalar_lea.vmem %s0, %s165
      %s167 = smul.u32 64, %s14
      %s168 = smul.u32 64, %s14
      %p169 = scmp.lt.s32.totalorder %s168, 127
      %s170 = scalar_select %p169, %s168, 127
      %s171 = smul.addr %s170, 8
      %s172 = scalar_lea.vmem %s3, %s171
      %s173 = smul.u32 64, %s14
      %v174 = vld [vmem:[%s166] sm:$0xff]
      %v175 = vld [vmem:[%s166 + $0x8] sm:$0xff]
      %v176 = vld [vmem:[%s166 + $0x10] sm:$0xff]
      %v177 = vld [vmem:[%s166 + $0x18] sm:$0xff]
      %v178 = vld [vmem:[%s166 + $0x20] sm:$0xff]
      %v179 = vld [vmem:[%s166 + $0x28] sm:$0xff]
      %v180 = vld [vmem:[%s166 + $0x30] sm:$0xff]
      %v181 = vld [vmem:[%s166 + $0x38] sm:$0xff]
      %v182 = vld [vmem:[%s166 + $0x40] sm:$0xff]
      %v183 = vld [vmem:[%s166 + $0x48] sm:$0xff]
      %v184 = vld [vmem:[%s166 + $0x50] sm:$0xff]
      %v185 = vld [vmem:[%s166 + $0x58] sm:$0xff]
      %v186 = vld [vmem:[%s166 + $0x60] sm:$0xff]
      %v187 = vld [vmem:[%s166 + $0x68] sm:$0xff]
      %v188 = vld [vmem:[%s166 + $0x70] sm:$0xff]
      %v189 = vld [vmem:[%s166 + $0x78] sm:$0xff]
      %v190 = vld [vmem:[%s166 + $0x80] sm:$0xff]
      %v191 = vld [vmem:[%s166 + $0x88] sm:$0xff]
      %v192 = vld [vmem:[%s166 + $0x90] sm:$0xff]
      %v193 = vld [vmem:[%s166 + $0x98] sm:$0xff]
      %v194 = vld [vmem:[%s166 + $0xa0] sm:$0xff]
      %v195 = vld [vmem:[%s166 + $0xa8] sm:$0xff]
      %v196 = vld [vmem:[%s166 + $0xb0] sm:$0xff]
      %v197 = vld [vmem:[%s166 + $0xb8] sm:$0xff]
      %v198 = vld [vmem:[%s166 + $0xc0] sm:$0xff]
      %v199 = vld [vmem:[%s166 + $0xc8] sm:$0xff]
      %v200 = vld [vmem:[%s166 + $0xd0] sm:$0xff]
      %v201 = vld [vmem:[%s166 + $0xd8] sm:$0xff]
      %v202 = vld [vmem:[%s166 + $0xe0] sm:$0xff]
      %v203 = vld [vmem:[%s166 + $0xe8] sm:$0xff]
      %v204 = vld [vmem:[%s166 + $0xf0] sm:$0xff]
      %v205 = vld [vmem:[%s166 + $0xf8] sm:$0xff]
      %v206 = vld [vmem:[%s166 + $0x100] sm:$0xff]
      %v207 = vld [vmem:[%s166 + $0x108] sm:$0xff]
      %v208 = vld [vmem:[%s166 + $0x110] sm:$0xff]
      %v209 = vld [vmem:[%s166 + $0x118] sm:$0xff]
      %v210 = vld [vmem:[%s166 + $0x120] sm:$0xff]
      %v211 = vld [vmem:[%s166 + $0x128] sm:$0xff]
      %v212 = vld [vmem:[%s166 + $0x130] sm:$0xff]
      %v213 = vld [vmem:[%s166 + $0x138] sm:$0xff]
      %v214 = vld [vmem:[%s166 + $0x140] sm:$0xff]
      %v215 = vld [vmem:[%s166 + $0x148] sm:$0xff]
      %v216 = vld [vmem:[%s166 + $0x150] sm:$0xff]
      %v217 = vld [vmem:[%s166 + $0x158] sm:$0xff]
      %v218 = vld [vmem:[%s166 + $0x160] sm:$0xff]
      %v219 = vld [vmem:[%s166 + $0x168] sm:$0xff]
      %v220 = vld [vmem:[%s166 + $0x170] sm:$0xff]
      %v221 = vld [vmem:[%s166 + $0x178] sm:$0xff]
      %v222 = vld [vmem:[%s166 + $0x180] sm:$0xff]
      %v223 = vld [vmem:[%s166 + $0x188] sm:$0xff]
      %v224 = vld [vmem:[%s166 + $0x190] sm:$0xff]
      %v225 = vld [vmem:[%s166 + $0x198] sm:$0xff]
      %v226 = vld [vmem:[%s166 + $0x1a0] sm:$0xff]
      %v227 = vld [vmem:[%s166 + $0x1a8] sm:$0xff]
      %v228 = vld [vmem:[%s166 + $0x1b0] sm:$0xff]
      %v229 = vld [vmem:[%s166 + $0x1b8] sm:$0xff]
      %v230 = vld [vmem:[%s166 + $0x1c0] sm:$0xff]
      %v231 = vld [vmem:[%s166 + $0x1c8] sm:$0xff]
      %v232 = vld [vmem:[%s166 + $0x1d0] sm:$0xff]
      %v233 = vld [vmem:[%s166 + $0x1d8] sm:$0xff]
      %v234 = vld [vmem:[%s166 + $0x1e0] sm:$0xff]
      %v235 = vld [vmem:[%s166 + $0x1e8] sm:$0xff]
      %v236 = vld [vmem:[%s166 + $0x1f0] sm:$0xff]
      %v237 = vld [vmem:[%s166 + $0x1f8] sm:$0xff]
      %v238 = vld [vmem:[%s1] sm:$0x1]
      %v240 = vlaneseq
      %v241 = vshrl.u32 %v240, 7
      %v242 = vsub.s32 0, %v241
      %v243 = vrot.slane %v238, %v242
      %v245 = vmul.f32 %v174, %v243
      %v246 = vmul.f32 %v175, %v243
      %v247 = vmul.f32 %v176, %v243
      %v248 = vmul.f32 %v177, %v243
      %v249 = vmul.f32 %v178, %v243
      %v250 = vmul.f32 %v179, %v243
      %v251 = vmul.f32 %v180, %v243
      %v252 = vmul.f32 %v181, %v243
      %v253 = vmul.f32 %v182, %v243
      %v254 = vmul.f32 %v183, %v243
      %v255 = vmul.f32 %v184, %v243
      %v256 = vmul.f32 %v185, %v243
      %v257 = vmul.f32 %v186, %v243
      %v258 = vmul.f32 %v187, %v243
      %v259 = vmul.f32 %v188, %v243
      %v260 = vmul.f32 %v189, %v243
      %v261 = vmul.f32 %v190, %v243
      %v262 = vmul.f32 %v191, %v243
      %v263 = vmul.f32 %v192, %v243
      %v264 = vmul.f32 %v193, %v243
      %v265 = vmul.f32 %v194, %v243
      %v266 = vmul.f32 %v195, %v243
      %v267 = vmul.f32 %v196, %v243
      %v268 = vmul.f32 %v197, %v243
      %v269 = vmul.f32 %v198, %v243
      %v270 = vmul.f32 %v199, %v243
      %v271 = vmul.f32 %v200, %v243
      %v272 = vmul.f32 %v201, %v243
      %v273 = vmul.f32 %v202, %v243
      %v274 = vmul.f32 %v203, %v243
      %v275 = vmul.f32 %v204, %v243
      %v276 = vmul.f32 %v205, %v243
      %v277 = vmul.f32 %v206, %v243
      %v278 = vmul.f32 %v207, %v243
      %v279 = vmul.f32 %v208, %v243
      %v280 = vmul.f32 %v209, %v243
      %v281 = vmul.f32 %v210, %v243
      %v282 = vmul.f32 %v211, %v243
      %v283 = vmul.f32 %v212, %v243
      %v284 = vmul.f32 %v213, %v243
      %v285 = vmul.f32 %v214, %v243
      %v286 = vmul.f32 %v215, %v243
      %v287 = vmul.f32 %v216, %v243
      %v288 = vmul.f32 %v217, %v243
      %v289 = vmul.f32 %v218, %v243
      %v290 = vmul.f32 %v219, %v243
      %v291 = vmul.f32 %v220, %v243
      %v292 = vmul.f32 %v221, %v243
      %v293 = vmul.f32 %v222, %v243
      %v294 = vmul.f32 %v223, %v243
      %v295 = vmul.f32 %v224, %v243
      %v296 = vmul.f32 %v225, %v243
      %v297 = vmul.f32 %v226, %v243
      %v298 = vmul.f32 %v227, %v243
      %v299 = vmul.f32 %v228, %v243
      %v300 = vmul.f32 %v229, %v243
      %v301 = vmul.f32 %v230, %v243
      %v302 = vmul.f32 %v231, %v243
      %v303 = vmul.f32 %v232, %v243
      %v304 = vmul.f32 %v233, %v243
      %v305 = vmul.f32 %v234, %v243
      %v306 = vmul.f32 %v235, %v243
      %v307 = vmul.f32 %v236, %v243
      %v308 = vmul.f32 %v237, %v243
      %v309 = vld [vmem:[%s2] sm:$0x1]
      %v311 = vlaneseq
      %v312 = vshrl.u32 %v311, 7
      %v313 = vsub.s32 0, %v312
      %v314 = vrot.slane %v309, %v313
      %v316 = vadd.f32 %v245, %v314
      %v317 = vadd.f32 %v246, %v314
      %v318 = vadd.f32 %v247, %v314
      %v319 = vadd.f32 %v248, %v314
      %v320 = vadd.f32 %v249, %v314
      %v321 = vadd.f32 %v250, %v314
      %v322 = vadd.f32 %v251, %v314
      %v323 = vadd.f32 %v252, %v314
      %v324 = vadd.f32 %v253, %v314
      %v325 = vadd.f32 %v254, %v314
      %v326 = vadd.f32 %v255, %v314
      %v327 = vadd.f32 %v256, %v314
      %v328 = vadd.f32 %v257, %v314
      %v329 = vadd.f32 %v258, %v314
      %v330 = vadd.f32 %v259, %v314
      %v331 = vadd.f32 %v260, %v314
      %v332 = vadd.f32 %v261, %v314
      %v333 = vadd.f32 %v262, %v314
      %v334 = vadd.f32 %v263, %v314
      %v335 = vadd.f32 %v264, %v314
      %v336 = vadd.f32 %v265, %v314
      %v337 = vadd.f32 %v266, %v314
      %v338 = vadd.f32 %v267, %v314
      %v339 = vadd.f32 %v268, %v314
      %v340 = vadd.f32 %v269, %v314
      %v341 = vadd.f32 %v270, %v314
      %v342 = vadd.f32 %v271, %v314
      %v343 = vadd.f32 %v272, %v314
      %v344 = vadd.f32 %v273, %v314
      %v345 = vadd.f32 %v274, %v314
      %v346 = vadd.f32 %v275, %v314
      %v347 = vadd.f32 %v276, %v314
      %v348 = vadd.f32 %v277, %v314
      %v349 = vadd.f32 %v278, %v314
      %v350 = vadd.f32 %v279, %v314
      %v351 = vadd.f32 %v280, %v314
      %v352 = vadd.f32 %v281, %v314
      %v353 = vadd.f32 %v282, %v314
      %v354 = vadd.f32 %v283, %v314
      %v355 = vadd.f32 %v284, %v314
      %v356 = vadd.f32 %v285, %v314
      %v357 = vadd.f32 %v286, %v314
      %v358 = vadd.f32 %v287, %v314
      %v359 = vadd.f32 %v288, %v314
      %v360 = vadd.f32 %v289, %v314
      %v361 = vadd.f32 %v290, %v314
      %v362 = vadd.f32 %v291, %v314
      %v363 = vadd.f32 %v292, %v314
      %v364 = vadd.f32 %v293, %v314
      %v365 = vadd.f32 %v294, %v314
      %v366 = vadd.f32 %v295, %v314
      %v367 = vadd.f32 %v296, %v314
      %v368 = vadd.f32 %v297, %v314
      %v369 = vadd.f32 %v298, %v314
      %v370 = vadd.f32 %v299, %v314
      %v371 = vadd.f32 %v300, %v314
      %v372 = vadd.f32 %v301, %v314
      %v373 = vadd.f32 %v302, %v314
      %v374 = vadd.f32 %v303, %v314
      %v375 = vadd.f32 %v304, %v314
      %v376 = vadd.f32 %v305, %v314
      %v377 = vadd.f32 %v306, %v314
      %v378 = vadd.f32 %v307, %v314
      %v379 = vadd.f32 %v308, %v314
      %v380 = vmax.f32 %v316, 0.0
      %v381 = vmax.f32 %v317, 0.0
      %v382 = vmax.f32 %v318, 0.0
      %v383 = vmax.f32 %v319, 0.0
      %v384 = vmax.f32 %v320, 0.0
      %v385 = vmax.f32 %v321, 0.0
      %v386 = vmax.f32 %v322, 0.0
      %v387 = vmax.f32 %v323, 0.0
      %v388 = vmax.f32 %v324, 0.0
      %v389 = vmax.f32 %v325, 0.0
      %v390 = vmax.f32 %v326, 0.0
      %v391 = vmax.f32 %v327, 0.0
      %v392 = vmax.f32 %v328, 0.0
      %v393 = vmax.f32 %v329, 0.0
      %v394 = vmax.f32 %v330, 0.0
      %v395 = vmax.f32 %v331, 0.0
      %v396 = vmax.f32 %v332, 0.0
      %v397 = vmax.f32 %v333, 0.0
      %v398 = vmax.f32 %v334, 0.0
      %v399 = vmax.f32 %v335, 0.0
      %v400 = vmax.f32 %v336, 0.0
      %v401 = vmax.f32 %v337, 0.0
      %v402 = vmax.f32 %v338, 0.0
      %v403 = vmax.f32 %v339, 0.0
      %v404 = vmax.f32 %v340, 0.0
      %v405 = vmax.f32 %v341, 0.0
      %v406 = vmax.f32 %v342, 0.0
      %v407 = vmax.f32 %v343, 0.0
      %v408 = vmax.f32 %v344, 0.0
      %v409 = vmax.f32 %v345, 0.0
      %v410 = vmax.f32 %v346, 0.0
      %v411 = vmax.f32 %v347, 0.0
      %v412 = vmax.f32 %v348, 0.0
      %v413 = vmax.f32 %v349, 0.0
      %v414 = vmax.f32 %v350, 0.0
      %v415 = vmax.f32 %v351, 0.0
      %v416 = vmax.f32 %v352, 0.0
      %v417 = vmax.f32 %v353, 0.0
      %v418 = vmax.f32 %v354, 0.0
      %v419 = vmax.f32 %v355, 0.0
      %v420 = vmax.f32 %v356, 0.0
      %v421 = vmax.f32 %v357, 0.0
      %v422 = vmax.f32 %v358, 0.0
      %v423 = vmax.f32 %v359, 0.0
      %v424 = vmax.f32 %v360, 0.0
      %v425 = vmax.f32 %v361, 0.0
      %v426 = vmax.f32 %v362, 0.0
      %v427 = vmax.f32 %v363, 0.0
      %v428 = vmax.f32 %v364, 0.0
      %v429 = vmax.f32 %v365, 0.0
      %v430 = vmax.f32 %v366, 0.0
      %v431 = vmax.f32 %v367, 0.0
      %v432 = vmax.f32 %v368, 0.0
      %v433 = vmax.f32 %v369, 0.0
      %v434 = vmax.f32 %v370, 0.0
      %v435 = vmax.f32 %v371, 0.0
      %v436 = vmax.f32 %v372, 0.0
      %v437 = vmax.f32 %v373, 0.0
      %v438 = vmax.f32 %v374, 0.0
      %v439 = vmax.f32 %v375, 0.0
      %v440 = vmax.f32 %v376, 0.0
      %v441 = vmax.f32 %v377, 0.0
      %v442 = vmax.f32 %v378, 0.0
      %v443 = vmax.f32 %v379, 0.0
      %444 = vst [vmem:[%s172] sm:$0xff] %v380
      %445 = vst [vmem:[%s172 + $0x8] sm:$0xff] %v381
      %446 = vst [vmem:[%s172 + $0x10] sm:$0xff] %v382
      %447 = vst [vmem:[%s172 + $0x18] sm:$0xff] %v383
      %448 = vst [vmem:[%s172 + $0x20] sm:$0xff] %v384
      %449 = vst [vmem:[%s172 + $0x28] sm:$0xff] %v385
      %450 = vst [vmem:[%s172 + $0x30] sm:$0xff] %v386
      %451 = vst [vmem:[%s172 + $0x38] sm:$0xff] %v387
      %452 = vst [vmem:[%s172 + $0x40] sm:$0xff] %v388
      %453 = vst [vmem:[%s172 + $0x48] sm:$0xff] %v389
      %454 = vst [vmem:[%s172 + $0x50] sm:$0xff] %v390
      %455 = vst [vmem:[%s172 + $0x58] sm:$0xff] %v391
      %456 = vst [vmem:[%s172 + $0x60] sm:$0xff] %v392
      %457 = vst [vmem:[%s172 + $0x68] sm:$0xff] %v393
      %458 = vst [vmem:[%s172 + $0x70] sm:$0xff] %v394
      %459 = vst [vmem:[%s172 + $0x78] sm:$0xff] %v395
      %460 = vst [vmem:[%s172 + $0x80] sm:$0xff] %v396
      %461 = vst [vmem:[%s172 + $0x88] sm:$0xff] %v397
      %462 = vst [vmem:[%s172 + $0x90] sm:$0xff] %v398
      %463 = vst [vmem:[%s172 + $0x98] sm:$0xff] %v399
      %464 = vst [vmem:[%s172 + $0xa0] sm:$0xff] %v400
      %465 = vst [vmem:[%s172 + $0xa8] sm:$0xff] %v401
      %466 = vst [vmem:[%s172 + $0xb0] sm:$0xff] %v402
      %467 = vst [vmem:[%s172 + $0xb8] sm:$0xff] %v403
      %468 = vst [vmem:[%s172 + $0xc0] sm:$0xff] %v404
      %469 = vst [vmem:[%s172 + $0xc8] sm:$0xff] %v405
      %470 = vst [vmem:[%s172 + $0xd0] sm:$0xff] %v406
      %471 = vst [vmem:[%s172 + $0xd8] sm:$0xff] %v407
      %472 = vst [vmem:[%s172 + $0xe0] sm:$0xff] %v408
      %473 = vst [vmem:[%s172 + $0xe8] sm:$0xff] %v409
      %474 = vst [vmem:[%s172 + $0xf0] sm:$0xff] %v410
      %475 = vst [vmem:[%s172 + $0xf8] sm:$0xff] %v411
      %476 = vst [vmem:[%s172 + $0x100] sm:$0xff] %v412
      %477 = vst [vmem:[%s172 + $0x108] sm:$0xff] %v413
      %478 = vst [vmem:[%s172 + $0x110] sm:$0xff] %v414
      %479 = vst [vmem:[%s172 + $0x118] sm:$0xff] %v415
      %480 = vst [vmem:[%s172 + $0x120] sm:$0xff] %v416
      %481 = vst [vmem:[%s172 + $0x128] sm:$0xff] %v417
      %482 = vst [vmem:[%s172 + $0x130] sm:$0xff] %v418
      %483 = vst [vmem:[%s172 + $0x138] sm:$0xff] %v419
      %484 = vst [vmem:[%s172 + $0x140] sm:$0xff] %v420
      %485 = vst [vmem:[%s172 + $0x148] sm:$0xff] %v421
      %486 = vst [vmem:[%s172 + $0x150] sm:$0xff] %v422
      %487 = vst [vmem:[%s172 + $0x158] sm:$0xff] %v423
      %488 = vst [vmem:[%s172 + $0x160] sm:$0xff] %v424
      %489 = vst [vmem:[%s172 + $0x168] sm:$0xff] %v425
      %490 = vst [vmem:[%s172 + $0x170] sm:$0xff] %v426
      %491 = vst [vmem:[%s172 + $0x178] sm:$0xff] %v427
      %492 = vst [vmem:[%s172 + $0x180] sm:$0xff] %v428
      %493 = vst [vmem:[%s172 + $0x188] sm:$0xff] %v429
      %494 = vst [vmem:[%s172 + $0x190] sm:$0xff] %v430
      %495 = vst [vmem:[%s172 + $0x198] sm:$0xff] %v431
      %496 = vst [vmem:[%s172 + $0x1a0] sm:$0xff] %v432
      %497 = vst [vmem:[%s172 + $0x1a8] sm:$0xff] %v433
      %498 = vst [vmem:[%s172 + $0x1b0] sm:$0xff] %v434
      %499 = vst [vmem:[%s172 + $0x1b8] sm:$0xff] %v435
      %500 = vst [vmem:[%s172 + $0x1c0] sm:$0xff] %v436
      %501 = vst [vmem:[%s172 + $0x1c8] sm:$0xff] %v437
      %502 = vst [vmem:[%s172 + $0x1d0] sm:$0xff] %v438
      %503 = vst [vmem:[%s172 + $0x1d8] sm:$0xff] %v439
      %504 = vst [vmem:[%s172 + $0x1e0] sm:$0xff] %v440
      %505 = vst [vmem:[%s172 + $0x1e8] sm:$0xff] %v441
      %506 = vst [vmem:[%s172 + $0x1f0] sm:$0xff] %v442
      %507 = vst [vmem:[%s172 + $0x1f8] sm:$0xff] %v443
      %s508 = smul.u32 64, %s14
      %p509 = scmp.lt.s32.totalorder %s508, 127
      %s510 = scalar_select %p509, %s508, 127
      %s511 = smul.addr %s510, 8
      %s512 = scalar_lea.vmem %s3, %s511
      // Predicated region
      $region33: #{up_conv_forward.3} parent=31 // pred_check
        %p513 = pneg %p100
      $region34: #{up_conv_forward.3} parent=31 // pred_check_branch
        %515 = sbr.rel (%p513) target = $region36
      $region35: #{up_conv_forward.3} parent=31 // pred_region
        %s516 = smul.u32 64, %s14
      $region36: #{up_conv_forward.3} parent=31 // pred_fallthru
        _
    $region32: #{up_conv_forward.3} parent=5 // pred_fallthru
      _
    %p517 = scmp.le.s32.totalorder 2, %s9
    // Predicated region
    $region37: #{up_conv_forward.3} parent=5 // pred_check
      %p518 = pneg %p517
    $region38: #{up_conv_forward.3} parent=5 // pred_check_branch
      %520 = sbr.rel (%p518) target = $region40
    $region39: #{up_conv_forward.3} parent=5 // pred_region
      %s521 = ssub.s32 %s9, 2
      // Predicated region
      $region41: #{up_conv_forward.3} parent=39 // pred_check
        %p522 = pneg %p106
      $region42: #{up_conv_forward.3} parent=39 // pred_check_branch
        %524 = sbr.rel (%p522) target = $region44
      $region43: #{up_conv_forward.3} parent=39 // pred_region
        %s525 = smul.u32 64, %s15
        %p526 = scmp.lt.s32.totalorder %s525, 127
        %s527 = scalar_select %p526, %s525, 127
        %s528 = smul.addr %s527, 8
        %s529 = scalar_lea.vmem %s3, %s528
      $region44: #{up_conv_forward.3} parent=39 // pred_fallthru
        _
    $region40: #{up_conv_forward.3} parent=5 // pred_fallthru
      _
  $region6: #{up_conv_forward.3} parent=0 // loop_footer
    %s13 = sadd.s32 1, %s9
  $region7: #{up_conv_forward.3} parent=0 // loop_footer_branch
    %8 = sbr.rel target = $region3
  $region8: #{up_conv_forward.3} parent=0 // loop_exit
    _

// kernel: up_conv_forward.2
$region0: #{up_conv_forward.2}
  #allocation0 [shape = 'u32[]', space=smem, size = 0x4, offset = 0x4, fixed_abs, tag = 'smem constant byte address 0x4 - core index']
  #allocation1 [shape = 'u32[144,128]{1,0:T(1,128)}', space=vmem, size = 0x12000, scoped, tag = 'internal scratch']
  %s0 = inlined_call_operand.vmem [shape: f32[1024,16], index: 0, kind: input, shape index: {}]
  %s1 = inlined_call_operand.vmem [shape: bf16[16,128], index: 1, kind: input, shape index: {}]
  %s2 = inlined_call_operand.vmem [shape: bf16[16,128], index: 2, kind: input, shape index: {}]
  %s3 = inlined_call_operand.vmem [shape: f32[8,1024], index: 3, kind: input, shape index: {}]
  %s4 = inlined_call_operand.vmem [shape: f32[1024,128], index: 4, kind: output, shape index: {0}]
  %s5 = inlined_call_operand.vmem [shape: f32[32,128], index: 5, kind: output, shape index: {1}]
  %6 = xla_tuple %s4, %s5
  %s7 = sld [smem:[#allocation0]]
  $region57: #{up_conv_forward.2} parent=0
    _
  %s9 = ssub.s32 1, %s7
  %s10 = scalar_select 0, %s9, %s7
  loop: start=0, step=1, limit=4
  $region2: #{up_conv_forward.2} parent=0 // loop_pre_header
    _
  $region3: #{up_conv_forward.2} parent=0 // loop_header
    %s12 = sphi 0, %s16
    %p13 = scmp.ge.s32.totalorder %s12, 4
    %s22 = sphi 0, %s24
    %s25 = sphi 0, %s22
    %s26 = sphi 0, %s25
    %s42 = sphi 0, %s26
    %s46 = sphi 0, %s46
    %s48 = sphi 0, %s46
    %s49 = sphi 0, %s48
    %s63 = sphi 0, %s49
    %s67 = sphi 0, %s67
    %s69 = sphi 0, %s67
    %s70 = sphi 0, %s69
    %s84 = sphi 0, %s70
    %s90 = sphi 0, %s92
    %s93 = sphi 0, %s90
    %s94 = sphi 0, %s93
    %s110 = sphi 0, %s94
    %s116 = sphi 0, %s118
    %s119 = sphi 0, %s116
    %s120 = sphi 0, %s119
    %s136 = sphi 0, %s120
    %s142 = sphi 0, %s144
    %s145 = sphi 0, %s142
    %s146 = sphi 0, %s145
    %s162 = sphi 0, %s146
  $region4: #{up_conv_forward.2} parent=0 // loop_header_branch
    %15 = sbr.rel (%p13) target = $region8
  $region5: #{up_conv_forward.2} parent=0 // loop_body
    %s17 = ssub.s32 %s12, 1
    %s18 = ssub.s32 %s12, 2
    %s19 = sadd.s32 %s12, 1
    %s20 = ssub.s32 %s12, %s19
    %p21 = scmp.eq.s32.totalorder %s20, 0
    %s23 = sadd.s32 %s22, 1
    %s24 = scalar_select %p21, %s22, %s23
    %p27 = pneg %p21
    %p28 = scmp.eq.s32.totalorder %s12, 1
    %p29 = por %p27, %p28
    %p30 = scmp.ne.s32.totalorder %s22, %s25
    %p31 = scmp.eq.s32.totalorder %s12, 0
    %p32 = por %p30, %p31
    %p33 = scmp.ne.s32.totalorder %s22, %s25
    %p34 = scmp.eq.s32.totalorder %s17, 1
    %p35 = por %p33, %p34
    %p36 = scmp.ne.s32.totalorder %s25, %s26
    %p37 = scmp.eq.s32.totalorder %s17, 0
    %p38 = por %p36, %p37
    %p39 = scmp.ne.s32.totalorder %s25, %s26
    %p40 = scmp.eq.s32.totalorder %s18, 1
    %p41 = por %p39, %p40
    %p43 = scmp.ne.s32.totalorder %s26, %s42
    %p44 = scmp.eq.s32.totalorder %s18, 0
    %p45 = por %p43, %p44
    %s47 = sadd.s32 %s46, 1
    %p50 = scmp.eq.s32.totalorder %s12, 1
    %p51 = scmp.ne.s32.totalorder %s46, %s48
    %p52 = scmp.eq.s32.totalorder %s12, 0
    %p53 = por %p51, %p52
    %p54 = scmp.ne.s32.totalorder %s46, %s48
    %p55 = scmp.eq.s32.totalorder %s17, 1
    %p56 = por %p54, %p55
    %p57 = scmp.ne.s32.totalorder %s48, %s49
    %p58 = scmp.eq.s32.totalorder %s17, 0
    %p59 = por %p57, %p58
    %p60 = scmp.ne.s32.totalorder %s48, %s49
    %p61 = scmp.eq.s32.totalorder %s18, 1
    %p62 = por %p60, %p61
    %p64 = scmp.ne.s32.totalorder %s49, %s63
    %p65 = scmp.eq.s32.totalorder %s18, 0
    %p66 = por %p64, %p65
    %s68 = sadd.s32 %s67, 1
    %p71 = scmp.eq.s32.totalorder %s12, 1
    %p72 = scmp.ne.s32.totalorder %s67, %s69
    %p73 = scmp.eq.s32.totalorder %s12, 0
    %p74 = por %p72, %p73
    %p75 = scmp.ne.s32.totalorder %s67, %s69
    %p76 = scmp.eq.s32.totalorder %s17, 1
    %p77 = por %p75, %p76
    %p78 = scmp.ne.s32.totalorder %s69, %s70
    %p79 = scmp.eq.s32.totalorder %s17, 0
    %p80 = por %p78, %p79
    %p81 = scmp.ne.s32.totalorder %s69, %s70
    %p82 = scmp.eq.s32.totalorder %s18, 1
    %p83 = por %p81, %p82
    %p85 = scmp.ne.s32.totalorder %s70, %s84
    %p86 = scmp.eq.s32.totalorder %s18, 0
    %p87 = por %p85, %p86
    %s88 = ssub.s32 %s12, %s19
    %p89 = scmp.eq.s32.totalorder %s88, 0
    %s91 = sadd.s32 %s90, 1
    %s92 = scalar_select %p89, %s90, %s91
    %p95 = pneg %p89
    %p96 = scmp.eq.s32.totalorder %s12, 1
    %p97 = por %p95, %p96
    %p98 = scmp.ne.s32.totalorder %s90, %s93
    %p99 = scmp.eq.s32.totalorder %s12, 0
    %p100 = por %p98, %p99
    %p101 = scmp.ne.s32.totalorder %s90, %s93
    %p102 = scmp.eq.s32.totalorder %s17, 1
    %p103 = por %p101, %p102
    %p104 = scmp.ne.s32.totalorder %s93, %s94
    %p105 = scmp.eq.s32.totalorder %s17, 0
    %p106 = por %p104, %p105
    %p107 = scmp.ne.s32.totalorder %s93, %s94
    %p108 = scmp.eq.s32.totalorder %s18, 1
    %p109 = por %p107, %p108
    %p111 = scmp.ne.s32.totalorder %s94, %s110
    %p112 = scmp.eq.s32.totalorder %s18, 0
    %p113 = por %p111, %p112
    %s114 = ssub.s32 %s12, %s19
    %p115 = scmp.eq.s32.totalorder %s114, 0
    %s117 = sadd.s32 %s116, 1
    %s118 = scalar_select %p115, %s116, %s117
    %p121 = pneg %p115
    %p122 = scmp.eq.s32.totalorder %s12, 1
    %p123 = por %p121, %p122
    %p124 = scmp.ne.s32.totalorder %s116, %s119
    %p125 = scmp.eq.s32.totalorder %s12, 0
    %p126 = por %p124, %p125
    %p127 = scmp.ne.s32.totalorder %s116, %s119
    %p128 = scmp.eq.s32.totalorder %s17, 1
    %p129 = por %p127, %p128
    %p130 = scmp.ne.s32.totalorder %s119, %s120
    %p131 = scmp.eq.s32.totalorder %s17, 0
    %p132 = por %p130, %p131
    %p133 = scmp.ne.s32.totalorder %s119, %s120
    %p134 = scmp.eq.s32.totalorder %s18, 1
    %p135 = por %p133, %p134
    %p137 = scmp.ne.s32.totalorder %s120, %s136
    %p138 = scmp.eq.s32.totalorder %s18, 0
    %p139 = por %p137, %p138
    %s140 = ssub.s32 %s12, %s19
    %p141 = scmp.eq.s32.totalorder %s140, 0
    %s143 = sadd.s32 %s142, 1
    %s144 = scalar_select %p141, %s142, %s143
    %p147 = pneg %p141
    %p148 = scmp.eq.s32.totalorder %s12, 1
    %p149 = por %p147, %p148
    %p150 = scmp.ne.s32.totalorder %s142, %s145
    %p151 = scmp.eq.s32.totalorder %s12, 0
    %p152 = por %p150, %p151
    %p153 = scmp.ne.s32.totalorder %s142, %s145
    %p154 = scmp.eq.s32.totalorder %s17, 1
    %p155 = por %p153, %p154
    %p156 = scmp.ne.s32.totalorder %s145, %s146
    %p157 = scmp.eq.s32.totalorder %s17, 0
    %p158 = por %p156, %p157
    %p159 = scmp.ne.s32.totalorder %s145, %s146
    %p160 = scmp.eq.s32.totalorder %s18, 1
    %p161 = por %p159, %p160
    %p163 = scmp.ne.s32.totalorder %s146, %s162
    %p164 = scmp.eq.s32.totalorder %s18, 0
    %p165 = por %p163, %p164
    %p166 = scmp.le.s32.totalorder 1, %s12
    %p167 = scmp.lt.s32.totalorder %s12, 3
    %p168 = pnand %p166, %p167
    %p169 = pneg %p168
    // Predicated region
    $region9: #{up_conv_forward.2} parent=5 // pred_check
      _
    $region10: #{up_conv_forward.2} parent=5 // pred_check_branch
      %171 = sbr.rel (%p168) target = $region12
    $region11: #{up_conv_forward.2} parent=5 // pred_region
      %s172 = ssub.s32 %s12, 1
      // Predicated region
      $region13: #{up_conv_forward.2} parent=11 // pred_check
        %p173 = pneg %p59
      $region14: #{up_conv_forward.2} parent=11 // pred_check_branch
        %175 = sbr.rel (%p173) target = $region16
      $region15: #{up_conv_forward.2} parent=11 // pred_region
        _
      $region16: #{up_conv_forward.2} parent=11 // pred_fallthru
        _
      // Predicated region
      $region17: #{up_conv_forward.2} parent=11 // pred_check
        %p176 = pneg %p80
      $region18: #{up_conv_forward.2} parent=11 // pred_check_branch
        %178 = sbr.rel (%p176) target = $region20
      $region19: #{up_conv_forward.2} parent=11 // pred_region
        _
      $region20: #{up_conv_forward.2} parent=11 // pred_fallthru
        _
    $region12: #{up_conv_forward.2} parent=5 // pred_fallthru
      _
    %p179 = scmp.lt.s32.totalorder %s12, 2
    // Predicated region
    $region21: #{up_conv_forward.2} parent=5 // pred_check
      %p180 = pneg %p179
    $region22: #{up_conv_forward.2} parent=5 // pred_check_branch
      %182 = sbr.rel (%p180) target = $region24
    $region23: #{up_conv_forward.2} parent=5 // pred_region
      // Predicated region
      $region25: #{up_conv_forward.2} parent=23 // pred_check
        %p183 = pneg %p32
      $region26: #{up_conv_forward.2} parent=23 // pred_check_branch
        %185 = sbr.rel (%p183) target = $region28
      $region27: #{up_conv_forward.2} parent=23 // pred_region
        %s186 = smul.u32 64, %s12
        %p187 = scmp.lt.s32.totalorder %s186, 127
        %s188 = scalar_select %p187, %s186, 127
        %s189 = smul.addr %s188, 8
        %s190 = scalar_lea.vmem %s0, %s189
        %s191 = smul.u32 64, %s12
      $region28: #{up_conv_forward.2} parent=23 // pred_fallthru
        _
      // Predicated region
      $region29: #{up_conv_forward.2} parent=23 // pred_check
        %p192 = pneg %p100
      $region30: #{up_conv_forward.2} parent=23 // pred_check_branch
        %194 = sbr.rel (%p192) target = $region32
      $region31: #{up_conv_forward.2} parent=23 // pred_region
        %s195 = smul.u32 4, %s12
        %p196 = scmp.lt.s32.totalorder %s195, 7
        %s197 = scalar_select %p196, %s195, 7
        %s198 = smul.addr %s197, 8
        %s199 = scalar_lea.vmem %s3, %s198
        %s200 = smul.u32 4, %s12
      $region32: #{up_conv_forward.2} parent=23 // pred_fallthru
        _
    $region24: #{up_conv_forward.2} parent=5 // pred_fallthru
      _
    %p201 = scmp.le.s32.totalorder 1, %s12
    %p202 = scmp.lt.s32.totalorder %s12, 3
    %p203 = pnand %p201, %p202
    %p204 = pneg %p203
    // Predicated region
    $region33: #{up_conv_forward.2} parent=5 // pred_check
      _
    $region34: #{up_conv_forward.2} parent=5 // pred_check_branch
      %206 = sbr.rel (%p203) target = $region36
    $region35: #{up_conv_forward.2} parent=5 // pred_region
      %s207 = ssub.s32 %s12, 1
      %s208 = smul.u32 64, %s17
      %p209 = scmp.lt.s32.totalorder %s208, 127
      %s210 = scalar_select %p209, %s208, 127
      %s211 = smul.addr %s210, 8
      %s212 = scalar_lea.vmem %s0, %s211
      %p213 = pneg %p38
      %p214 = pneg %p35
      %p215 = pneg %p59
      %p216 = pneg %p56
      %p217 = pneg %p80
      %p218 = pneg %p77
      %s219 = smul.u32 4, %s17
      %p220 = scmp.lt.s32.totalorder %s219, 7
      %s221 = scalar_select %p220, %s219, 7
      %s222 = smul.addr %s221, 8
      %s223 = scalar_lea.vmem %s3, %s222
      %p224 = pneg %p106
      %p225 = pneg %p103
      %p226 = pneg %p132
      %p227 = pneg %p129
      %s228 = smul.u32 64, %s17
      %p229 = scmp.lt.s32.totalorder %s228, 127
      %s230 = scalar_select %p229, %s228, 127
      %s231 = smul.addr %s230, 8
      %s232 = scalar_lea.vmem %s4, %s231
      %p233 = pneg %p158
      %p234 = pneg %p155
      %s235 = smul.u32 2, %s17
      %p236 = scmp.lt.s32.totalorder %s235, 3
      %s237 = scalar_select %p236, %s235, 3
      %s238 = smul.addr %s237, 8
      %s239 = scalar_lea.vmem %s5, %s238
      %s240 = smul.u32 64, %s17
      %p241 = scmp.lt.s32.totalorder %s240, 127
      %s242 = scalar_select %p241, %s240, 127
      %s243 = smul.addr %s242, 8
      %s244 = scalar_lea.vmem %s0, %s243
      %s245 = smul.u32 64, %s17
      %s246 = smul.u32 4, %s17
      %p247 = scmp.lt.s32.totalorder %s246, 7
      %s248 = scalar_select %p247, %s246, 7
      %s249 = smul.addr %s248, 8
      %s250 = scalar_lea.vmem %s3, %s249
      %s251 = smul.u32 4, %s17
      %s252 = smul.u32 64, %s17
      %p253 = scmp.lt.s32.totalorder %s252, 127
      %s254 = scalar_select %p253, %s252, 127
      %s255 = smul.addr %s254, 8
      %s256 = scalar_lea.vmem %s4, %s255
      %s257 = smul.u32 64, %s17
      %s258 = smul.u32 2, %s17
      %p259 = scmp.lt.s32.totalorder %s258, 3
      %s260 = scalar_select %p259, %s258, 3
      %s261 = smul.addr %s260, 8
      %s262 = scalar_lea.vmem %s5, %s261
      %s263 = smul.u32 2, %s17
      %v265 = vld [vmem:[%s244] sm:$0xff]
      %v266 = vld [vmem:[%s244 + $0x8] sm:$0xff]
      %v267 = vld [vmem:[%s244 + $0x10] sm:$0xff]
      %v268 = vld [vmem:[%s244 + $0x18] sm:$0xff]
      %v269 = vld [vmem:[%s244 + $0x20] sm:$0xff]
      %v270 = vld [vmem:[%s244 + $0x28] sm:$0xff]
      %v271 = vld [vmem:[%s244 + $0x30] sm:$0xff]
      %v272 = vld [vmem:[%s244 + $0x38] sm:$0xff]
      %v273 = vld [vmem:[%s244 + $0x40] sm:$0xff]
      %v274 = vld [vmem:[%s244 + $0x48] sm:$0xff]
      %v275 = vld [vmem:[%s244 + $0x50] sm:$0xff]
      %v276 = vld [vmem:[%s244 + $0x58] sm:$0xff]
      %v277 = vld [vmem:[%s244 + $0x60] sm:$0xff]
      %v278 = vld [vmem:[%s244 + $0x68] sm:$0xff]
      %v279 = vld [vmem:[%s244 + $0x70] sm:$0xff]
      %v280 = vld [vmem:[%s244 + $0x78] sm:$0xff]
      %v281 = vld [vmem:[%s244 + $0x80] sm:$0xff]
      %v282 = vld [vmem:[%s244 + $0x88] sm:$0xff]
      %v283 = vld [vmem:[%s244 + $0x90] sm:$0xff]
      %v284 = vld [vmem:[%s244 + $0x98] sm:$0xff]
      %v285 = vld [vmem:[%s244 + $0xa0] sm:$0xff]
      %v286 = vld [vmem:[%s244 + $0xa8] sm:$0xff]
      %v287 = vld [vmem:[%s244 + $0xb0] sm:$0xff]
      %v288 = vld [vmem:[%s244 + $0xb8] sm:$0xff]
      %v289 = vld [vmem:[%s244 + $0xc0] sm:$0xff]
      %v290 = vld [vmem:[%s244 + $0xc8] sm:$0xff]
      %v291 = vld [vmem:[%s244 + $0xd0] sm:$0xff]
      %v292 = vld [vmem:[%s244 + $0xd8] sm:$0xff]
      %v293 = vld [vmem:[%s244 + $0xe0] sm:$0xff]
      %v294 = vld [vmem:[%s244 + $0xe8] sm:$0xff]
      %v295 = vld [vmem:[%s244 + $0xf0] sm:$0xff]
      %v296 = vld [vmem:[%s244 + $0xf8] sm:$0xff]
      %v297 = vld [vmem:[%s244 + $0x100] sm:$0xff]
      %v298 = vld [vmem:[%s244 + $0x108] sm:$0xff]
      %v299 = vld [vmem:[%s244 + $0x110] sm:$0xff]
      %v300 = vld [vmem:[%s244 + $0x118] sm:$0xff]
      %v301 = vld [vmem:[%s244 + $0x120] sm:$0xff]
      %v302 = vld [vmem:[%s244 + $0x128] sm:$0xff]
      %v303 = vld [vmem:[%s244 + $0x130] sm:$0xff]
      %v304 = vld [vmem:[%s244 + $0x138] sm:$0xff]
      %v305 = vld [vmem:[%s244 + $0x140] sm:$0xff]
      %v306 = vld [vmem:[%s244 + $0x148] sm:$0xff]
      %v307 = vld [vmem:[%s244 + $0x150] sm:$0xff]
      %v308 = vld [vmem:[%s244 + $0x158] sm:$0xff]
      %v309 = vld [vmem:[%s244 + $0x160] sm:$0xff]
      %v310 = vld [vmem:[%s244 + $0x168] sm:$0xff]
      %v311 = vld [vmem:[%s244 + $0x170] sm:$0xff]
      %v312 = vld [vmem:[%s244 + $0x178] sm:$0xff]
      %v313 = vld [vmem:[%s244 + $0x180] sm:$0xff]
      %v314 = vld [vmem:[%s244 + $0x188] sm:$0xff]
      %v315 = vld [vmem:[%s244 + $0x190] sm:$0xff]
      %v316 = vld [vmem:[%s244 + $0x198] sm:$0xff]
      %v317 = vld [vmem:[%s244 + $0x1a0] sm:$0xff]
      %v318 = vld [vmem:[%s244 + $0x1a8] sm:$0xff]
      %v319 = vld [vmem:[%s244 + $0x1b0] sm:$0xff]
      %v320 = vld [vmem:[%s244 + $0x1b8] sm:$0xff]
      %v321 = vld [vmem:[%s244 + $0x1c0] sm:$0xff]
      %v322 = vld [vmem:[%s244 + $0x1c8] sm:$0xff]
      %v323 = vld [vmem:[%s244 + $0x1d0] sm:$0xff]
      %v324 = vld [vmem:[%s244 + $0x1d8] sm:$0xff]
      %v325 = vld [vmem:[%s244 + $0x1e0] sm:$0xff]
      %v326 = vld [vmem:[%s244 + $0x1e8] sm:$0xff]
      %v327 = vld [vmem:[%s244 + $0x1f0] sm:$0xff]
      %v328 = vld [vmem:[%s244 + $0x1f8] sm:$0xff]
      %v329 = vpack.c.bf16 %v266, %v265
      %v330 = vpack.c.bf16 %v268, %v267
      %v331 = vpack.c.bf16 %v270, %v269
      %v332 = vpack.c.bf16 %v272, %v271
      %v333 = vpack.c.bf16 %v274, %v273
      %v334 = vpack.c.bf16 %v276, %v275
      %v335 = vpack.c.bf16 %v278, %v277
      %v336 = vpack.c.bf16 %v280, %v279
      %v337 = vpack.c.bf16 %v282, %v281
      %v338 = vpack.c.bf16 %v284, %v283
      %v339 = vpack.c.bf16 %v286, %v285
      %v340 = vpack.c.bf16 %v288, %v287
      %v341 = vpack.c.bf16 %v290, %v289
      %v342 = vpack.c.bf16 %v292, %v291
      %v343 = vpack.c.bf16 %v294, %v293
      %v344 = vpack.c.bf16 %v296, %v295
      %v345 = vpack.c.bf16 %v298, %v297
      %v346 = vpack.c.bf16 %v300, %v299
      %v347 = vpack.c.bf16 %v302, %v301
      %v348 = vpack.c.bf16 %v304, %v303
      %v349 = vpack.c.bf16 %v306, %v305
      %v350 = vpack.c.bf16 %v308, %v307
      %v351 = vpack.c.bf16 %v310, %v309
      %v352 = vpack.c.bf16 %v312, %v311
      %v353 = vpack.c.bf16 %v314, %v313
      %v354 = vpack.c.bf16 %v316, %v315
      %v355 = vpack.c.bf16 %v318, %v317
      %v356 = vpack.c.bf16 %v320, %v319
      %v357 = vpack.c.bf16 %v322, %v321
      %v358 = vpack.c.bf16 %v324, %v323
      %v359 = vpack.c.bf16 %v326, %v325
      %v360 = vpack.c.bf16 %v328, %v327
      %v361 = vunpack.c.l.bf16 %v329
      %v362 = vunpack.c.h.bf16 %v329
      %v363 = vunpack.c.l.bf16 %v330
      %v364 = vunpack.c.h.bf16 %v330
      %v365 = vunpack.c.l.bf16 %v331
      %v366 = vunpack.c.h.bf16 %v331
      %v367 = vunpack.c.l.bf16 %v332
      %v368 = vunpack.c.h.bf16 %v332
      %v369 = vunpack.c.l.bf16 %v333
      %v370 = vunpack.c.h.bf16 %v333
      %v371 = vunpack.c.l.bf16 %v334
      %v372 = vunpack.c.h.bf16 %v334
      %v373 = vunpack.c.l.bf16 %v335
      %v374 = vunpack.c.h.bf16 %v335
      %v375 = vunpack.c.l.bf16 %v336
      %v376 = vunpack.c.h.bf16 %v336
      %v377 = vunpack.c.l.bf16 %v337
      %v378 = vunpack.c.h.bf16 %v337
      %v379 = vunpack.c.l.bf16 %v338
      %v380 = vunpack.c.h.bf16 %v338
      %v381 = vunpack.c.l.bf16 %v339
      %v382 = vunpack.c.h.bf16 %v339
      %v383 = vunpack.c.l.bf16 %v340
      %v384 = vunpack.c.h.bf16 %v340
      %v385 = vunpack.c.l.bf16 %v341
      %v386 = vunpack.c.h.bf16 %v341
      %v387 = vunpack.c.l.bf16 %v342
      %v388 = vunpack.c.h.bf16 %v342
      %v389 = vunpack.c.l.bf16 %v343
      %v390 = vunpack.c.h.bf16 %v343
      %v391 = vunpack.c.l.bf16 %v344
      %v392 = vunpack.c.h.bf16 %v344
      %v393 = vunpack.c.l.bf16 %v345
      %v394 = vunpack.c.h.bf16 %v345
      %v395 = vunpack.c.l.bf16 %v346
      %v396 = vunpack.c.h.bf16 %v346
      %v397 = vunpack.c.l.bf16 %v347
      %v398 = vunpack.c.h.bf16 %v347
      %v399 = vunpack.c.l.bf16 %v348
      %v400 = vunpack.c.h.bf16 %v348
      %v401 = vunpack.c.l.bf16 %v349
      %v402 = vunpack.c.h.bf16 %v349
      %v403 = vunpack.c.l.bf16 %v350
      %v404 = vunpack.c.h.bf16 %v350
      %v405 = vunpack.c.l.bf16 %v351
      %v406 = vunpack.c.h.bf16 %v351
      %v407 = vunpack.c.l.bf16 %v352
      %v408 = vunpack.c.h.bf16 %v352
      %v409 = vunpack.c.l.bf16 %v353
      %v410 = vunpack.c.h.bf16 %v353
      %v411 = vunpack.c.l.bf16 %v354
      %v412 = vunpack.c.h.bf16 %v354
      %v413 = vunpack.c.l.bf16 %v355
      %v414 = vunpack.c.h.bf16 %v355
      %v415 = vunpack.c.l.bf16 %v356
      %v416 = vunpack.c.h.bf16 %v356
      %v417 = vunpack.c.l.bf16 %v357
      %v418 = vunpack.c.h.bf16 %v357
      %v419 = vunpack.c.l.bf16 %v358
      %v420 = vunpack.c.h.bf16 %v358
      %v421 = vunpack.c.l.bf16 %v359
      %v422 = vunpack.c.h.bf16 %v359
      %v423 = vunpack.c.l.bf16 %v360
      %v424 = vunpack.c.h.bf16 %v360
      %v425 = vsub.f32 %v265, %v361
      %v426 = vsub.f32 %v266, %v362
      %v427 = vsub.f32 %v267, %v363
      %v428 = vsub.f32 %v268, %v364
      %v429 = vsub.f32 %v269, %v365
      %v430 = vsub.f32 %v270, %v366
      %v431 = vsub.f32 %v271, %v367
      %v432 = vsub.f32 %v272, %v368
      %v433 = vsub.f32 %v273, %v369
      %v434 = vsub.f32 %v274, %v370
      %v435 = vsub.f32 %v275, %v371
      %v436 = vsub.f32 %v276, %v372
      %v437 = vsub.f32 %v277, %v373
      %v438 = vsub.f32 %v278, %v374
      %v439 = vsub.f32 %v279, %v375
      %v440 = vsub.f32 %v280, %v376
      %v441 = vsub.f32 %v281, %v377
      %v442 = vsub.f32 %v282, %v378
      %v443 = vsub.f32 %v283, %v379
      %v444 = vsub.f32 %v284, %v380
      %v445 = vsub.f32 %v285, %v381
      %v446 = vsub.f32 %v286, %v382
      %v447 = vsub.f32 %v287, %v383
      %v448 = vsub.f32 %v288, %v384
      %v449 = vsub.f32 %v289, %v385
      %v450 = vsub.f32 %v290, %v386
      %v451 = vsub.f32 %v291, %v387
      %v452 = vsub.f32 %v292, %v388
      %v453 = vsub.f32 %v293, %v389
      %v454 = vsub.f32 %v294, %v390
      %v455 = vsub.f32 %v295, %v391
      %v456 = vsub.f32 %v296, %v392
      %v457 = vsub.f32 %v297, %v393
      %v458 = vsub.f32 %v298, %v394
      %v459 = vsub.f32 %v299, %v395
      %v460 = vsub.f32 %v300, %v396
      %v461 = vsub.f32 %v301, %v397
      %v462 = vsub.f32 %v302, %v398
      %v463 = vsub.f32 %v303, %v399
      %v464 = vsub.f32 %v304, %v400
      %v465 = vsub.f32 %v305, %v401
      %v466 = vsub.f32 %v306, %v402
      %v467 = vsub.f32 %v307, %v403
      %v468 = vsub.f32 %v308, %v404
      %v469 = vsub.f32 %v309, %v405
      %v470 = vsub.f32 %v310, %v406
      %v471 = vsub.f32 %v311, %v407
      %v472 = vsub.f32 %v312, %v408
      %v473 = vsub.f32 %v313, %v409
      %v474 = vsub.f32 %v314, %v410
      %v475 = vsub.f32 %v315, %v411
      %v476 = vsub.f32 %v316, %v412
      %v477 = vsub.f32 %v317, %v413
      %v478 = vsub.f32 %v318, %v414
      %v479 = vsub.f32 %v319, %v415
      %v480 = vsub.f32 %v320, %v416
      %v481 = vsub.f32 %v321, %v417
      %v482 = vsub.f32 %v322, %v418
      %v483 = vsub.f32 %v323, %v419
      %v484 = vsub.f32 %v324, %v420
      %v485 = vsub.f32 %v325, %v421
      %v486 = vsub.f32 %v326, %v422
      %v487 = vsub.f32 %v327, %v423
      %v488 = vsub.f32 %v328, %v424
      %v489 = vpack.c.bf16 %v426, %v425
      %v490 = vpack.c.bf16 %v428, %v427
      %v491 = vpack.c.bf16 %v430, %v429
      %v492 = vpack.c.bf16 %v432, %v431
      %v493 = vpack.c.bf16 %v434, %v433
      %v494 = vpack.c.bf16 %v436, %v435
      %v495 = vpack.c.bf16 %v438, %v437
      %v496 = vpack.c.bf16 %v440, %v439
      %v497 = vpack.c.bf16 %v442, %v441
      %v498 = vpack.c.bf16 %v444, %v443
      %v499 = vpack.c.bf16 %v446, %v445
      %v500 = vpack.c.bf16 %v448, %v447
      %v501 = vpack.c.bf16 %v450, %v449
      %v502 = vpack.c.bf16 %v452, %v451
      %v503 = vpack.c.bf16 %v454, %v453
      %v504 = vpack.c.bf16 %v456, %v455
      %v505 = vpack.c.bf16 %v458, %v457
      %v506 = vpack.c.bf16 %v460, %v459
      %v507 = vpack.c.bf16 %v462, %v461
      %v508 = vpack.c.bf16 %v464, %v463
      %v509 = vpack.c.bf16 %v466, %v465
      %v510 = vpack.c.bf16 %v468, %v467
      %v511 = vpack.c.bf16 %v470, %v469
      %v512 = vpack.c.bf16 %v472, %v471
      %v513 = vpack.c.bf16 %v474, %v473
      %v514 = vpack.c.bf16 %v476, %v475
      %v515 = vpack.c.bf16 %v478, %v477
      %v516 = vpack.c.bf16 %v480, %v479
      %v517 = vpack.c.bf16 %v482, %v481
      %v518 = vpack.c.bf16 %v484, %v483
      %v519 = vpack.c.bf16 %v486, %v485
      %v520 = vpack.c.bf16 %v488, %v487
      %v521 = vld [vmem:[%s1] sm:$0xf]
      %v522 = vld [vmem:[%s1 + $0x4] sm:$0xf]
      %v525 = vunpack.c.l.b16 %v521
      %v526 = vunpack.c.l.b16 %v522
      %v527 = vpack.c.b16 %v526, %v525
      %vm529 = vcmask 130048
      %v531 = vsel %vm529, %v489, 0
      %v534 = vsel %vm529, %v490, 0
      %v537 = vsel %vm529, %v491, 0
      %v540 = vsel %vm529, %v492, 0
      %v543 = vsel %vm529, %v493, 0
      %v546 = vsel %vm529, %v494, 0
      %v549 = vsel %vm529, %v495, 0
      %v552 = vsel %vm529, %v496, 0
      %v555 = vsel %vm529, %v497, 0
      %v558 = vsel %vm529, %v498, 0
      %v561 = vsel %vm529, %v499, 0
      %v564 = vsel %vm529, %v500, 0
      %v567 = vsel %vm529, %v501, 0
      %v570 = vsel %vm529, %v502, 0
      %v573 = vsel %vm529, %v503, 0
      %v576 = vsel %vm529, %v504, 0
      %v579 = vsel %vm529, %v505, 0
      %v582 = vsel %vm529, %v506, 0
      %v585 = vsel %vm529, %v507, 0
      %v588 = vsel %vm529, %v508, 0
      %v591 = vsel %vm529, %v509, 0
      %v594 = vsel %vm529, %v510, 0
      %v597 = vsel %vm529, %v511, 0
      %v600 = vsel %vm529, %v512, 0
      %v603 = vsel %vm529, %v513, 0
      %v606 = vsel %vm529, %v514, 0
      %v609 = vsel %vm529, %v515, 0
      %v612 = vsel %vm529, %v516, 0
      %v615 = vsel %vm529, %v517, 0
      %v618 = vsel %vm529, %v518, 0
      %v621 = vsel %vm529, %v519, 0
      %v624 = vsel %vm529, %v520, 0
      %626 = vmatprep.subr.bf16.mxu0 0
      %627 = vmatpush1.bf16.msra.mxu0 %v527
      %628 = vmatprep.subr.bf16.mxu0 0
      %629 = vmatpush1.bf16.msra.mxu0 0
      %630 = vmatprep.subr.bf16.mxu0 0
      %631 = vmatpush1.bf16.msra.mxu0 0
      %632 = vmatprep.subr.bf16.mxu0 0
      %633 = vmatpush1.bf16.msra.mxu0 0
      %634 = vmatprep.subr.bf16.mxu0 0
      %635 = vmatpush1.bf16.msra.mxu0 0
      %636 = vmatprep.subr.bf16.mxu0 0
      %637 = vmatpush1.bf16.msra.mxu0 0
      %638 = vmatprep.subr.bf16.mxu0 0
      %639 = vmatpush1.bf16.msra.mxu0 0
      %640 = vmatprep.subr.bf16.mxu0 0
      %641 = vmatpush1.bf16.msra.mxu0 0
      %642 = vmatprep.subr.bf16.mxu0 0
      %643 = vmatpush1.bf16.msra.mxu0 0
      %644 = vmatprep.subr.bf16.mxu0 0
      %645 = vmatpush1.bf16.msra.mxu0 0
      %646 = vmatprep.subr.bf16.mxu0 0
      %647 = vmatpush1.bf16.msra.mxu0 0
      %648 = vmatprep.subr.bf16.mxu0 0
      %649 = vmatpush1.bf16.msra.mxu0 0
      %650 = vmatprep.subr.bf16.mxu0 0
      %651 = vmatpush1.bf16.msra.mxu0 0
      %652 = vmatprep.subr.bf16.mxu0 0
      %653 = vmatpush1.bf16.msra.mxu0 0
      %654 = vmatprep.subr.bf16.mxu0 0
      %655 = vmatpush1.bf16.msra.mxu0 0
      %656 = vmatprep.subr.bf16.mxu0 0
      %657 = vmatpush1.bf16.msra.mxu0 0
      %658 = vmatprep.mubr.bf16.mxu0 0
      %659 = vmatmul.mubr.bf16.gmra.mrb[0].mxu0 %v531
      %v660 = vpop.f32.mrb[0].mxu0
      %v661 = vadd.f32 0.0, %v660
      %v662 = vpop.f32.mrb[0].mxu0
      %v663 = vpop.f32.mrb[0].mxu0
      %v664 = vadd.f32 0.0, %v663
      %v665 = vpop.f32.mrb[0].mxu0
      %666 = vmatprep.mubr.bf16.mxu0 0
      %667 = vmatmul.mubr.bf16.gmra.mrb[0].mxu0 %v534
      %v668 = vpop.f32.mrb[0].mxu0
      %v669 = vadd.f32 0.0, %v668
      %v670 = vpop.f32.mrb[0].mxu0
      %v671 = vpop.f32.mrb[0].mxu0
      %v672 = vadd.f32 0.0, %v671
      %v673 = vpop.f32.mrb[0].mxu0
      %674 = vmatprep.mubr.bf16.mxu0 0
      %675 = vmatmul.mubr.bf16.gmra.mrb[0].mxu0 %v537
      %v676 = vpop.f32.mrb[0].mxu0
      %v677 = vadd.f32 0.0, %v676
      %v678 = vpop.f32.mrb[0].mxu0
      %v679 = vpop.f32.mrb[0].mxu0
      %v680 = vadd.f32 0.0, %v679
      %v681 = vpop.f32.mrb[0].mxu0
      %682 = vmatprep.mubr.bf16.mxu0 0
      %683 = vmatmul.mubr.bf16.gmra.mrb[0].mxu0 %v540
      %v684 = vpop.f32.mrb[0].mxu0
      %v685 = vadd.f32 0.0, %v684
      %v686 = vpop.f32.mrb[0].mxu0
      %v687 = vpop.f32.mrb[0].mxu0
      %v688 = vadd.f32 0.0, %v687
      %v689 = vpop.f32.mrb[0].mxu0
      %690 = vmatprep.mubr.bf16.mxu0 0
      %691 = vmatmul.mubr.bf16.gmra.mrb[0].mxu0 %v543
      %v692 = vpop.f32.mrb[0].mxu0
      %v693 = vadd.f32 0.0, %v692
      %v694 = vpop.f32.mrb[0].mxu0
      %v695 = vpop.f32.mrb[0].mxu0
      %v696 = vadd.f32 0.0, %v695
      %v697 = vpop.f32.mrb[0].mxu0
      %698 = vmatprep.mubr.bf16.mxu0 0
      %699 = vmatmul.mubr.bf16.gmra.mrb[0].mxu0 %v546
      %v700 = vpop.f32.mrb[0].mxu0
      %v701 = vadd.f32 0.0, %v700
      %v702 = vpop.f32.mrb[0].mxu0
      %v703 = vpop.f32.mrb[0].mxu0
      %v704 = vadd.f32 0.0, %v703
      %v705 = vpop.f32.mrb[0].mxu0
      %706 = vmatprep.mubr.bf16.mxu0 0
      %707 = vmatmul.mubr.bf16.gmra.mrb[0].mxu0 %v549
      %v708 = vpop.f32.mrb[0].mxu0
      %v709 = vadd.f32 0.0, %v708
      %v710 = vpop.f32.mrb[0].mxu0
      %v711 = vpop.f32.mrb[0].mxu0
      %v712 = vadd.f32 0.0, %v711
      %v713 = vpop.f32.mrb[0].mxu0
      %714 = vmatprep.mubr.bf16.mxu0 0
      %715 = vmatmul.mubr.bf16.gmra.mrb[0].mxu0 %v552
      %v716 = vpop.f32.mrb[0].mxu0
      %v717 = vadd.f32 0.0, %v716
      %v718 = vpop.f32.mrb[0].mxu0
      %v719 = vpop.f32.mrb[0].mxu0
      %v720 = vadd.f32 0.0, %v719
      %v721 = vpop.f32.mrb[0].mxu0
      %722 = vmatprep.mubr.bf16.mxu0 0
      %723 = vmatmul.mubr.bf16.gmra.mrb[0].mxu0 %v555
      %v724 = vpop.f32.mrb[0].mxu0
      %v725 = vadd.f32 0.0, %v724
      %v726 = vpop.f32.mrb[0].mxu0
      %v727 = vpop.f32.mrb[0].mxu0
      %v728 = vadd.f32 0.0, %v727
      %v729 = vpop.f32.mrb[0].mxu0
      %730 = vmatprep.mubr.bf16.mxu0 0
      %731 = vmatmul.mubr.bf16.gmra.mrb[0].mxu0 %v558
      %v732 = vpop.f32.mrb[0].mxu0
      %v733 = vadd.f32 0.0, %v732
      %v734 = vpop.f32.mrb[0].mxu0
      %v735 = vpop.f32.mrb[0].mxu0
      %v736 = vadd.f32 0.0, %v735
      %v737 = vpop.f32.mrb[0].mxu0
      %738 = vmatprep.mubr.bf16.mxu0 0
      %739 = vmatmul.mubr.bf16.gmra.mrb[0].mxu0 %v561
      %v740 = vpop.f32.mrb[0].mxu0
      %v741 = vadd.f32 0.0, %v740
      %v742 = vpop.f32.mrb[0].mxu0
      %v743 = vpop.f32.mrb[0].mxu0
      %v744 = vadd.f32 0.0, %v743
      %v745 = vpop.f32.mrb[0].mxu0
      %746 = vmatprep.mubr.bf16.mxu0 0
      %747 = vmatmul.mubr.bf16.gmra.mrb[0].mxu0 %v564
      %v748 = vpop.f32.mrb[0].mxu0
      %v749 = vadd.f32 0.0, %v748
      %v750 = vpop.f32.mrb[0].mxu0
      %v751 = vpop.f32.mrb[0].mxu0
      %v752 = vadd.f32 0.0, %v751
      %v753 = vpop.f32.mrb[0].mxu0
      %754 = vmatprep.mubr.bf16.mxu0 0
      %755 = vmatmul.mubr.bf16.gmra.mrb[0].mxu0 %v567
      %v756 = vpop.f32.mrb[0].mxu0
      %v757 = vadd.f32 0.0, %v756
      %v758 = vpop.f32.mrb[0].mxu0
      %v759 = vpop.f32.mrb[0].mxu0
      %v760 = vadd.f32 0.0, %v759
      %v761 = vpop.f32.mrb[0].mxu0
      %762 = vmatprep.mubr.bf16.mxu0 0
      %763 = vmatmul.mubr.bf16.gmra.mrb[0].mxu0 %v570
      %v764 = vpop.f32.mrb[0].mxu0
      %v765 = vadd.f32 0.0, %v764
      %v766 = vpop.f32.mrb[0].mxu0
      %v767 = vpop.f32.mrb[0].mxu0
      %v768 = vadd.f32 0.0, %v767
      %v769 = vpop.f32.mrb[0].mxu0
      %770 = vmatprep.mubr.bf16.mxu0 0
      %771 = vmatmul.mubr.bf16.gmra.mrb[0].mxu0 %v573
      %v772 = vpop.f32.mrb[0].mxu0
      %v773 = vadd.f32 0.0, %v772
      %v774 = vpop.f32.mrb[0].mxu0
      %v775 = vpop.f32.mrb[0].mxu0
      %v776 = vadd.f32 0.0, %v775
      %v777 = vpop.f32.mrb[0].mxu0
      %778 = vmatprep.mubr.bf16.mxu0 0
      %779 = vmatmul.mubr.bf16.gmra.mrb[0].mxu0 %v576
      %v780 = vpop.f32.mrb[0].mxu0
      %v781 = vadd.f32 0.0, %v780
      %v782 = vpop.f32.mrb[0].mxu0
      %v783 = vpop.f32.mrb[0].mxu0
      %v784 = vadd.f32 0.0, %v783
      %v785 = vpop.f32.mrb[0].mxu0
      %786 = vmatprep.mubr.bf16.mxu0 0
      %787 = vmatmul.mubr.bf16.gmra.mrb[0].mxu0 %v579
      %v788 = vpop.f32.mrb[0].mxu0
      %v789 = vadd.f32 0.0, %v788
      %v790 = vpop.f32.mrb[0].mxu0
      %v791 = vpop.f32.mrb[0].mxu0
      %v792 = vadd.f32 0.0, %v791
      %v793 = vpop.f32.mrb[0].mxu0
      %794 = vmatprep.mubr.bf16.mxu0 0
      %795 = vmatmul.mubr.bf16.gmra.mrb[0].mxu0 %v582
      %v796 = vpop.f32.mrb[0].mxu0
      %v797 = vadd.f32 0.0, %v796
      %v798 = vpop.f32.mrb[0].mxu0
      %v799 = vpop.f32.mrb[0].mxu0
      %v800 = vadd.f32 0.0, %v799
      %v801 = vpop.f32.mrb[0].mxu0
      %802 = vmatprep.mubr.bf16.mxu0 0
      %803 = vmatmul.mubr.bf16.gmra.mrb[0].mxu0 %v585
      %v804 = vpop.f32.mrb[0].mxu0
      %v805 = vadd.f32 0.0, %v804
      %v806 = vpop.f32.mrb[0].mxu0
      %v807 = vpop.f32.mrb[0].mxu0
      %v808 = vadd.f32 0.0, %v807
      %v809 = vpop.f32.mrb[0].mxu0
      %810 = vmatprep.mubr.bf16.mxu0 0
      %811 = vmatmul.mubr.bf16.gmra.mrb[0].mxu0 %v588
      %v812 = vpop.f32.mrb[0].mxu0
      %v813 = vadd.f32 0.0, %v812
      %v814 = vpop.f32.mrb[0].mxu0
      %v815 = vpop.f32.mrb[0].mxu0
      %v816 = vadd.f32 0.0, %v815
      %v817 = vpop.f32.mrb[0].mxu0
      %818 = vmatprep.mubr.bf16.mxu0 0
      %819 = vmatmul.mubr.bf16.gmra.mrb[0].mxu0 %v591
      %v820 = vpop.f32.mrb[0].mxu0
      %v821 = vadd.f32 0.0, %v820
      %v822 = vpop.f32.mrb[0].mxu0
      %v823 = vpop.f32.mrb[0].mxu0
      %v824 = vadd.f32 0.0, %v823
      %v825 = vpop.f32.mrb[0].mxu0
      %826 = vmatprep.mubr.bf16.mxu0 0
      %827 = vmatmul.mubr.bf16.gmra.mrb[0].mxu0 %v594
      %v828 = vpop.f32.mrb[0].mxu0
      %v829 = vadd.f32 0.0, %v828
      %v830 = vpop.f32.mrb[0].mxu0
      %v831 = vpop.f32.mrb[0].mxu0
      %v832 = vadd.f32 0.0, %v831
      %v833 = vpop.f32.mrb[0].mxu0
      %834 = vmatprep.mubr.bf16.mxu0 0
      %835 = vmatmul.mubr.bf16.gmra.mrb[0].mxu0 %v597
      %v836 = vpop.f32.mrb[0].mxu0
      %v837 = vadd.f32 0.0, %v836
      %v838 = vpop.f32.mrb[0].mxu0
      %v839 = vpop.f32.mrb[0].mxu0
      %v840 = vadd.f32 0.0, %v839
      %v841 = vpop.f32.mrb[0].mxu0
      %842 = vmatprep.mubr.bf16.mxu0 0
      %843 = vmatmul.mubr.bf16.gmra.mrb[0].mxu0 %v600
      %v844 = vpop.f32.mrb[0].mxu0
      %v845 = vadd.f32 0.0, %v844
      %v846 = vpop.f32.mrb[0].mxu0
      %v847 = vpop.f32.mrb[0].mxu0
      %v848 = vadd.f32 0.0, %v847
      %v849 = vpop.f32.mrb[0].mxu0
      %850 = vmatprep.mubr.bf16.mxu0 0
      %851 = vmatmul.mubr.bf16.gmra.mrb[0].mxu0 %v603
      %v852 = vpop.f32.mrb[0].mxu0
      %v853 = vadd.f32 0.0, %v852
      %v854 = vpop.f32.mrb[0].mxu0
      %v855 = vpop.f32.mrb[0].mxu0
      %v856 = vadd.f32 0.0, %v855
      %v857 = vpop.f32.mrb[0].mxu0
      %858 = vmatprep.mubr.bf16.mxu0 0
      %859 = vmatmul.mubr.bf16.gmra.mrb[0].mxu0 %v606
      %v860 = vpop.f32.mrb[0].mxu0
      %v861 = vadd.f32 0.0, %v860
      %v862 = vpop.f32.mrb[0].mxu0
      %v863 = vpop.f32.mrb[0].mxu0
      %v864 = vadd.f32 0.0, %v863
      %v865 = vpop.f32.mrb[0].mxu0
      %866 = vmatprep.mubr.bf16.mxu0 0
      %867 = vmatmul.mubr.bf16.gmra.mrb[0].mxu0 %v609
      %v868 = vpop.f32.mrb[0].mxu0
      %v869 = vadd.f32 0.0, %v868
      %v870 = vpop.f32.mrb[0].mxu0
      %v871 = vpop.f32.mrb[0].mxu0
      %v872 = vadd.f32 0.0, %v871
      %v873 = vpop.f32.mrb[0].mxu0
      %874 = vmatprep.mubr.bf16.mxu0 0
      %875 = vmatmul.mubr.bf16.gmra.mrb[0].mxu0 %v612
      %v876 = vpop.f32.mrb[0].mxu0
      %v877 = vadd.f32 0.0, %v876
      %v878 = vpop.f32.mrb[0].mxu0
      %v879 = vpop.f32.mrb[0].mxu0
      %v880 = vadd.f32 0.0, %v879
      %v881 = vpop.f32.mrb[0].mxu0
      %882 = vmatprep.mubr.bf16.mxu0 0
      %883 = vmatmul.mubr.bf16.gmra.mrb[0].mxu0 %v615
      %v884 = vpop.f32.mrb[0].mxu0
      %v885 = vadd.f32 0.0, %v884
      %v886 = vpop.f32.mrb[0].mxu0
      %v887 = vpop.f32.mrb[0].mxu0
      %v888 = vadd.f32 0.0, %v887
      %v889 = vpop.f32.mrb[0].mxu0
      %890 = vmatprep.mubr.bf16.mxu0 0
      %891 = vmatmul.mubr.bf16.gmra.mrb[0].mxu0 %v618
      %v892 = vpop.f32.mrb[0].mxu0
      %v893 = vadd.f32 0.0, %v892
      %v894 = vpop.f32.mrb[0].mxu0
      %v895 = vpop.f32.mrb[0].mxu0
      %v896 = vadd.f32 0.0, %v895
      %v897 = vpop.f32.mrb[0].mxu0
      %898 = vmatprep.mubr.bf16.mxu0 0
      %899 = vmatmul.mubr.bf16.gmra.mrb[0].mxu0 %v621
      %v900 = vpop.f32.mrb[0].mxu0
      %v901 = vadd.f32 0.0, %v900
      %v902 = vpop.f32.mrb[0].mxu0
      %v903 = vpop.f32.mrb[0].mxu0
      %v904 = vadd.f32 0.0, %v903
      %v905 = vpop.f32.mrb[0].mxu0
      %906 = vmatprep.mubr.bf16.mxu0 0
      %907 = vmatmul.mubr.bf16.gmra.mrb[0].mxu0 %v624
      %v908 = vpop.f32.mrb[0].mxu0
      %v909 = vadd.f32 0.0, %v908
      %v910 = vpop.f32.mrb[0].mxu0
      %v911 = vpop.f32.mrb[0].mxu0
      %v912 = vadd.f32 0.0, %v911
      %v913 = vpop.f32.mrb[0].mxu0
      %914 = vdwg.mxu0
      %v916 = vsel %vm529, %v329, 0
      %v919 = vsel %vm529, %v330, 0
      %v922 = vsel %vm529, %v331, 0
      %v925 = vsel %vm529, %v332, 0
      %v928 = vsel %vm529, %v333, 0
      %v931 = vsel %vm529, %v334, 0
      %v934 = vsel %vm529, %v335, 0
      %v937 = vsel %vm529, %v336, 0
      %v940 = vsel %vm529, %v337, 0
      %v943 = vsel %vm529, %v338, 0
      %v946 = vsel %vm529, %v339, 0
      %v949 = vsel %vm529, %v340, 0
      %v952 = vsel %vm529, %v341, 0
      %v955 = vsel %vm529, %v342, 0
      %v958 = vsel %vm529, %v343, 0
      %v961 = vsel %vm529, %v344, 0
      %v964 = vsel %vm529, %v345, 0
      %v967 = vsel %vm529, %v346, 0
      %v970 = vsel %vm529, %v347, 0
      %v973 = vsel %vm529, %v348, 0
      %v976 = vsel %vm529, %v349, 0
      %v979 = vsel %vm529, %v350, 0
      %v982 = vsel %vm529, %v351, 0
      %v985 = vsel %vm529, %v352, 0
      %v988 = vsel %vm529, %v353, 0
      %v991 = vsel %vm529, %v354, 0
      %v994 = vsel %vm529, %v355, 0
      %v997 = vsel %vm529, %v356, 0
      %v1000 = vsel %vm529, %v357, 0
      %v1003 = vsel %vm529, %v358, 0
      %v1006 = vsel %vm529, %v359, 0
      %v1009 = vsel %vm529, %v360, 0
      %1011 = vmatprep.subr.bf16.mxu0 0
      %1012 = vmatpush1.bf16.msra.mxu0 %v527
      %1013 = vmatprep.subr.bf16.mxu0 0
      %1014 = vmatpush1.bf16.msra.mxu0 0
      %1015 = vmatprep.subr.bf16.mxu0 0
      %1016 = vmatpush1.bf16.msra.mxu0 0
      %1017 = vmatprep.subr.bf16.mxu0 0
      %1018 = vmatpush1.bf16.msra.mxu0 0
      %1019 = vmatprep.subr.bf16.mxu0 0
      %1020 = vmatpush1.bf16.msra.mxu0 0
      %1021 = vmatprep.subr.bf16.mxu0 0
      %1022 = vmatpush1.bf16.msra.mxu0 0
      %1023 = vmatprep.subr.bf16.mxu0 0
      %1024 = vmatpush1.bf16.msra.mxu0 0
      %1025 = vmatprep.subr.bf16.mxu0 0
      %1026 = vmatpush1.bf16.msra.mxu0 0
      %1027 = vmatprep.subr.bf16.mxu0 0
      %1028 = vmatpush1.bf16.msra.mxu0 0
      %1029 = vmatprep.subr.bf16.mxu0 0
      %1030 = vmatpush1.bf16.msra.mxu0 0
      %1031 = vmatprep.subr.bf16.mxu0 0
      %1032 = vmatpush1.bf16.msra.mxu0 0
      %1033 = vmatprep.subr.bf16.mxu0 0
      %1034 = vmatpush1.bf16.msra.mxu0 0
      %1035 = vmatprep.subr.bf16.mxu0 0
      %1036 = vmatpush1.bf16.msra.mxu0 0
      %1037 = vmatprep.subr.bf16.mxu0 0
      %1038 = vmatpush1.bf16.msra.mxu0 0
      %1039 = vmatprep.subr.bf16.mxu0 0
      %1040 = vmatpush1.bf16.msra.mxu0 0
      %1041 = vmatprep.subr.bf16.mxu0 0
      %1042 = vmatpush1.bf16.msra.mxu0 0
      %1043 = vmatprep.mubr.bf16.mxu0 0
      %1044 = vmatmul.mubr.bf16.gmra.mrb[0].mxu0 %v916
      %v1045 = vpop.f32.mrb[0].mxu0
      %v1046 = vadd.f32 %v661, %v1045
      %v1047 = vpop.f32.mrb[0].mxu0
      %v1048 = vpop.f32.mrb[0].mxu0
      %v1049 = vadd.f32 %v664, %v1048
      %v1050 = vpop.f32.mrb[0].mxu0
      %1051 = vmatprep.mubr.bf16.mxu0 0
      %1052 = vmatmul.mubr.bf16.gmra.mrb[0].mxu0 %v919
      %v1053 = vpop.f32.mrb[0].mxu0
      %v1054 = vadd.f32 %v669, %v1053
      %v1055 = vpop.f32.mrb[0].mxu0
      %v1056 = vpop.f32.mrb[0].mxu0
      %v1057 = vadd.f32 %v672, %v1056
      %v1058 = vpop.f32.mrb[0].mxu0
      %1059 = vmatprep.mubr.bf16.mxu0 0
      %1060 = vmatmul.mubr.bf16.gmra.mrb[0].mxu0 %v922
      %v1061 = vpop.f32.mrb[0].mxu0
      %v1062 = vadd.f32 %v677, %v1061
      %v1063 = vpop.f32.mrb[0].mxu0
      %v1064 = vpop.f32.mrb[0].mxu0
      %v1065 = vadd.f32 %v680, %v1064
      %v1066 = vpop.f32.mrb[0].mxu0
      %1067 = vmatprep.mubr.bf16.mxu0 0
      %1068 = vmatmul.mubr.bf16.gmra.mrb[0].mxu0 %v925
      %v1069 = vpop.f32.mrb[0].mxu0
      %v1070 = vadd.f32 %v685, %v1069
      %v1071 = vpop.f32.mrb[0].mxu0
      %v1072 = vpop.f32.mrb[0].mxu0
      %v1073 = vadd.f32 %v688, %v1072
      %v1074 = vpop.f32.mrb[0].mxu0
      %1075 = vmatprep.mubr.bf16.mxu0 0
      %1076 = vmatmul.mubr.bf16.gmra.mrb[0].mxu0 %v928
      %v1077 = vpop.f32.mrb[0].mxu0
      %v1078 = vadd.f32 %v693, %v1077
      %v1079 = vpop.f32.mrb[0].mxu0
      %v1080 = vpop.f32.mrb[0].mxu0
      %v1081 = vadd.f32 %v696, %v1080
      %v1082 = vpop.f32.mrb[0].mxu0
      %1083 = vmatprep.mubr.bf16.mxu0 0
      %1084 = vmatmul.mubr.bf16.gmra.mrb[0].mxu0 %v931
      %v1085 = vpop.f32.mrb[0].mxu0
      %v1086 = vadd.f32 %v701, %v1085
      %v1087 = vpop.f32.mrb[0].mxu0
      %v1088 = vpop.f32.mrb[0].mxu0
      %v1089 = vadd.f32 %v704, %v1088
      %v1090 = vpop.f32.mrb[0].mxu0
      %1091 = vmatprep.mubr.bf16.mxu0 0
      %1092 = vmatmul.mubr.bf16.gmra.mrb[0].mxu0 %v934
      %v1093 = vpop.f32.mrb[0].mxu0
      %v1094 = vadd.f32 %v709, %v1093
      %v1095 = vpop.f32.mrb[0].mxu0
      %v1096 = vpop.f32.mrb[0].mxu0
      %v1097 = vadd.f32 %v712, %v1096
      %v1098 = vpop.f32.mrb[0].mxu0
      %1099 = vmatprep.mubr.bf16.mxu0 0
      %1100 = vmatmul.mubr.bf16.gmra.mrb[0].mxu0 %v937
      %v1101 = vpop.f32.mrb[0].mxu0
      %v1102 = vadd.f32 %v717, %v1101
      %v1103 = vpop.f32.mrb[0].mxu0
      %v1104 = vpop.f32.mrb[0].mxu0
      %v1105 = vadd.f32 %v720, %v1104
      %v1106 = vpop.f32.mrb[0].mxu0
      %1107 = vmatprep.mubr.bf16.mxu0 0
      %1108 = vmatmul.mubr.bf16.gmra.mrb[0].mxu0 %v940
      %v1109 = vpop.f32.mrb[0].mxu0
      %v1110 = vadd.f32 %v725, %v1109
      %v1111 = vpop.f32.mrb[0].mxu0
      %v1112 = vpop.f32.mrb[0].mxu0
      %v1113 = vadd.f32 %v728, %v1112
      %v1114 = vpop.f32.mrb[0].mxu0
      %1115 = vmatprep.mubr.bf16.mxu0 0
      %1116 = vmatmul.mubr.bf16.gmra.mrb[0].mxu0 %v943
      %v1117 = vpop.f32.mrb[0].mxu0
      %v1118 = vadd.f32 %v733, %v1117
      %v1119 = vpop.f32.mrb[0].mxu0
      %v1120 = vpop.f32.mrb[0].mxu0
      %v1121 = vadd.f32 %v736, %v1120
      %v1122 = vpop.f32.mrb[0].mxu0
      %1123 = vmatprep.mubr.bf16.mxu0 0
      %1124 = vmatmul.mubr.bf16.gmra.mrb[0].mxu0 %v946
      %v1125 = vpop.f32.mrb[0].mxu0
      %v1126 = vadd.f32 %v741, %v1125
      %v1127 = vpop.f32.mrb[0].mxu0
      %v1128 = vpop.f32.mrb[0].mxu0
      %v1129 = vadd.f32 %v744, %v1128
      %v1130 = vpop.f32.mrb[0].mxu0
      %1131 = vmatprep.mubr.bf16.mxu0 0
      %1132 = vmatmul.mubr.bf16.gmra.mrb[0].mxu0 %v949
      %v1133 = vpop.f32.mrb[0].mxu0
      %v1134 = vadd.f32 %v749, %v1133
      %v1135 = vpop.f32.mrb[0].mxu0
      %v1136 = vpop.f32.mrb[0].mxu0
      %v1137 = vadd.f32 %v752, %v1136
      %v1138 = vpop.f32.mrb[0].mxu0
      %1139 = vmatprep.mubr.bf16.mxu0 0
      %1140 = vmatmul.mubr.bf16.gmra.mrb[0].mxu0 %v952
      %v1141 = vpop.f32.mrb[0].mxu0
      %v1142 = vadd.f32 %v757, %v1141
      %v1143 = vpop.f32.mrb[0].mxu0
      %v1144 = vpop.f32.mrb[0].mxu0
      %v1145 = vadd.f32 %v760, %v1144
      %v1146 = vpop.f32.mrb[0].mxu0
      %1147 = vmatprep.mubr.bf16.mxu0 0
      %1148 = vmatmul.mubr.bf16.gmra.mrb[0].mxu0 %v955
      %v1149 = vpop.f32.mrb[0].mxu0
      %v1150 = vadd.f32 %v765, %v1149
      %v1151 = vpop.f32.mrb[0].mxu0
      %v1152 = vpop.f32.mrb[0].mxu0
      %v1153 = vadd.f32 %v768, %v1152
      %v1154 = vpop.f32.mrb[0].mxu0
      %1155 = vmatprep.mubr.bf16.mxu0 0
      %1156 = vmatmul.mubr.bf16.gmra.mrb[0].mxu0 %v958
      %v1157 = vpop.f32.mrb[0].mxu0
      %v1158 = vadd.f32 %v773, %v1157
      %v1159 = vpop.f32.mrb[0].mxu0
      %v1160 = vpop.f32.mrb[0].mxu0
      %v1161 = vadd.f32 %v776, %v1160
      %v1162 = vpop.f32.mrb[0].mxu0
      %1163 = vmatprep.mubr.bf16.mxu0 0
      %1164 = vmatmul.mubr.bf16.gmra.mrb[0].mxu0 %v961
      %v1165 = vpop.f32.mrb[0].mxu0
      %v1166 = vadd.f32 %v781, %v1165
      %v1167 = vpop.f32.mrb[0].mxu0
      %v1168 = vpop.f32.mrb[0].mxu0
      %v1169 = vadd.f32 %v784, %v1168
      %v1170 = vpop.f32.mrb[0].mxu0
      %1171 = vmatprep.mubr.bf16.mxu0 0
      %1172 = vmatmul.mubr.bf16.gmra.mrb[0].mxu0 %v964
      %v1173 = vpop.f32.mrb[0].mxu0
      %v1174 = vadd.f32 %v789, %v1173
      %v1175 = vpop.f32.mrb[0].mxu0
      %v1176 = vpop.f32.mrb[0].mxu0
      %v1177 = vadd.f32 %v792, %v1176
      %v1178 = vpop.f32.mrb[0].mxu0
      %1179 = vmatprep.mubr.bf16.mxu0 0
      %1180 = vmatmul.mubr.bf16.gmra.mrb[0].mxu0 %v967
      %v1181 = vpop.f32.mrb[0].mxu0
      %v1182 = vadd.f32 %v797, %v1181
      %v1183 = vpop.f32.mrb[0].mxu0
      %v1184 = vpop.f32.mrb[0].mxu0
      %v1185 = vadd.f32 %v800, %v1184
      %v1186 = vpop.f32.mrb[0].mxu0
      %1187 = vmatprep.mubr.bf16.mxu0 0
      %1188 = vmatmul.mubr.bf16.gmra.mrb[0].mxu0 %v970
      %v1189 = vpop.f32.mrb[0].mxu0
      %v1190 = vadd.f32 %v805, %v1189
      %v1191 = vpop.f32.mrb[0].mxu0
      %v1192 = vpop.f32.mrb[0].mxu0
      %v1193 = vadd.f32 %v808, %v1192
      %v1194 = vpop.f32.mrb[0].mxu0
      %1195 = vmatprep.mubr.bf16.mxu0 0
      %1196 = vmatmul.mubr.bf16.gmra.mrb[0].mxu0 %v973
      %v1197 = vpop.f32.mrb[0].mxu0
      %v1198 = vadd.f32 %v813, %v1197
      %v1199 = vpop.f32.mrb[0].mxu0
      %v1200 = vpop.f32.mrb[0].mxu0
      %v1201 = vadd.f32 %v816, %v1200
      %v1202 = vpop.f32.mrb[0].mxu0
      %1203 = vmatprep.mubr.bf16.mxu0 0
      %1204 = vmatmul.mubr.bf16.gmra.mrb[0].mxu0 %v976
      %v1205 = vpop.f32.mrb[0].mxu0
      %v1206 = vadd.f32 %v821, %v1205
      %v1207 = vpop.f32.mrb[0].mxu0
      %v1208 = vpop.f32.mrb[0].mxu0
      %v1209 = vadd.f32 %v824, %v1208
      %v1210 = vpop.f32.mrb[0].mxu0
      %1211 = vmatprep.mubr.bf16.mxu0 0
      %1212 = vmatmul.mubr.bf16.gmra.mrb[0].mxu0 %v979
      %v1213 = vpop.f32.mrb[0].mxu0
      %v1214 = vadd.f32 %v829, %v1213
      %v1215 = vpop.f32.mrb[0].mxu0
      %v1216 = vpop.f32.mrb[0].mxu0
      %v1217 = vadd.f32 %v832, %v1216
      %v1218 = vpop.f32.mrb[0].mxu0
      %1219 = vmatprep.mubr.bf16.mxu0 0
      %1220 = vmatmul.mubr.bf16.gmra.mrb[0].mxu0 %v982
      %v1221 = vpop.f32.mrb[0].mxu0
      %v1222 = vadd.f32 %v837, %v1221
      %v1223 = vpop.f32.mrb[0].mxu0
      %v1224 = vpop.f32.mrb[0].mxu0
      %v1225 = vadd.f32 %v840, %v1224
      %v1226 = vpop.f32.mrb[0].mxu0
      %1227 = vmatprep.mubr.bf16.mxu0 0
      %1228 = vmatmul.mubr.bf16.gmra.mrb[0].mxu0 %v985
      %v1229 = vpop.f32.mrb[0].mxu0
      %v1230 = vadd.f32 %v845, %v1229
      %v1231 = vpop.f32.mrb[0].mxu0
      %v1232 = vpop.f32.mrb[0].mxu0
      %v1233 = vadd.f32 %v848, %v1232
      %v1234 = vpop.f32.mrb[0].mxu0
      %1235 = vmatprep.mubr.bf16.mxu0 0
      %1236 = vmatmul.mubr.bf16.gmra.mrb[0].mxu0 %v988
      %v1237 = vpop.f32.mrb[0].mxu0
      %v1238 = vadd.f32 %v853, %v1237
      %v1239 = vpop.f32.mrb[0].mxu0
      %v1240 = vpop.f32.mrb[0].mxu0
      %v1241 = vadd.f32 %v856, %v1240
      %v1242 = vpop.f32.mrb[0].mxu0
      %1243 = vmatprep.mubr.bf16.mxu0 0
      %1244 = vmatmul.mubr.bf16.gmra.mrb[0].mxu0 %v991
      %v1245 = vpop.f32.mrb[0].mxu0
      %v1246 = vadd.f32 %v861, %v1245
      %v1247 = vpop.f32.mrb[0].mxu0
      %v1248 = vpop.f32.mrb[0].mxu0
      %v1249 = vadd.f32 %v864, %v1248
      %v1250 = vpop.f32.mrb[0].mxu0
      %1251 = vmatprep.mubr.bf16.mxu0 0
      %1252 = vmatmul.mubr.bf16.gmra.mrb[0].mxu0 %v994
      %v1253 = vpop.f32.mrb[0].mxu0
      %v1254 = vadd.f32 %v869, %v1253
      %v1255 = vpop.f32.mrb[0].mxu0
      %v1256 = vpop.f32.mrb[0].mxu0
      %v1257 = vadd.f32 %v872, %v1256
      %v1258 = vpop.f32.mrb[0].mxu0
      %1259 = vmatprep.mubr.bf16.mxu0 0
      %1260 = vmatmul.mubr.bf16.gmra.mrb[0].mxu0 %v997
      %v1261 = vpop.f32.mrb[0].mxu0
      %v1262 = vadd.f32 %v877, %v1261
      %v1263 = vpop.f32.mrb[0].mxu0
      %v1264 = vpop.f32.mrb[0].mxu0
      %v1265 = vadd.f32 %v880, %v1264
      %v1266 = vpop.f32.mrb[0].mxu0
      %1267 = vmatprep.mubr.bf16.mxu0 0
      %1268 = vmatmul.mubr.bf16.gmra.mrb[0].mxu0 %v1000
      %v1269 = vpop.f32.mrb[0].mxu0
      %v1270 = vadd.f32 %v885, %v1269
      %v1271 = vpop.f32.mrb[0].mxu0
      %v1272 = vpop.f32.mrb[0].mxu0
      %v1273 = vadd.f32 %v888, %v1272
      %v1274 = vpop.f32.mrb[0].mxu0
      %1275 = vmatprep.mubr.bf16.mxu0 0
      %1276 = vmatmul.mubr.bf16.gmra.mrb[0].mxu0 %v1003
      %v1277 = vpop.f32.mrb[0].mxu0
      %v1278 = vadd.f32 %v893, %v1277
      %v1279 = vpop.f32.mrb[0].mxu0
      %v1280 = vpop.f32.mrb[0].mxu0
      %v1281 = vadd.f32 %v896, %v1280
      %v1282 = vpop.f32.mrb[0].mxu0
      %1283 = vmatprep.mubr.bf16.mxu0 0
      %1284 = vmatmul.mubr.bf16.gmra.mrb[0].mxu0 %v1006
      %v1285 = vpop.f32.mrb[0].mxu0
      %v1286 = vadd.f32 %v901, %v1285
      %v1287 = vpop.f32.mrb[0].mxu0
      %v1288 = vpop.f32.mrb[0].mxu0
      %v1289 = vadd.f32 %v904, %v1288
      %v1290 = vpop.f32.mrb[0].mxu0
      %1291 = vmatprep.mubr.bf16.mxu0 0
      %1292 = vmatmul.mubr.bf16.gmra.mrb[0].mxu0 %v1009
      %v1293 = vpop.f32.mrb[0].mxu0
      %v1294 = vadd.f32 %v909, %v1293
      %v1295 = vpop.f32.mrb[0].mxu0
      %v1296 = vpop.f32.mrb[0].mxu0
      %v1297 = vadd.f32 %v912, %v1296
      %v1298 = vpop.f32.mrb[0].mxu0
      %1299 = vdwg.mxu0
      %v1300 = vld [vmem:[%s2] sm:$0xf]
      %v1301 = vld [vmem:[%s2 + $0x4] sm:$0xf]
      %v1304 = vunpack.c.l.b16 %v1300
      %v1305 = vunpack.c.l.b16 %v1301
      %v1306 = vpack.c.b16 %v1305, %v1304
      %1308 = vmatprep.subr.bf16.mxu0 0
      %1309 = vmatpush1.bf16.msra.mxu0 %v1306
      %1310 = vmatprep.subr.bf16.mxu0 0
      %1311 = vmatpush1.bf16.msra.mxu0 0
      %1312 = vmatprep.subr.bf16.mxu0 0
      %1313 = vmatpush1.bf16.msra.mxu0 0
      %1314 = vmatprep.subr.bf16.mxu0 0
      %1315 = vmatpush1.bf16.msra.mxu0 0
      %1316 = vmatprep.subr.bf16.mxu0 0
      %1317 = vmatpush1.bf16.msra.mxu0 0
      %1318 = vmatprep.subr.bf16.mxu0 0
      %1319 = vmatpush1.bf16.msra.mxu0 0
      %1320 = vmatprep.subr.bf16.mxu0 0
      %1321 = vmatpush1.bf16.msra.mxu0 0
      %1322 = vmatprep.subr.bf16.mxu0 0
      %1323 = vmatpush1.bf16.msra.mxu0 0
      %1324 = vmatprep.subr.bf16.mxu0 0
      %1325 = vmatpush1.bf16.msra.mxu0 0
      %1326 = vmatprep.subr.bf16.mxu0 0
      %1327 = vmatpush1.bf16.msra.mxu0 0
      %1328 = vmatprep.subr.bf16.mxu0 0
      %1329 = vmatpush1.bf16.msra.mxu0 0
      %1330 = vmatprep.subr.bf16.mxu0 0
      %1331 = vmatpush1.bf16.msra.mxu0 0
      %1332 = vmatprep.subr.bf16.mxu0 0
      %1333 = vmatpush1.bf16.msra.mxu0 0
      %1334 = vmatprep.subr.bf16.mxu0 0
      %1335 = vmatpush1.bf16.msra.mxu0 0
      %1336 = vmatprep.subr.bf16.mxu0 0
      %1337 = vmatpush1.bf16.msra.mxu0 0
      %1338 = vmatprep.subr.bf16.mxu0 0
      %1339 = vmatpush1.bf16.msra.mxu0 0
      %1340 = vmatprep.mubr.bf16.mxu0 0
      %1341 = vmatmul.mubr.bf16.gmra.mrb[0].mxu0 %v916
      %v1342 = vpop.f32.mrb[0].mxu0
      %v1343 = vadd.f32 0.0, %v1342
      %v1344 = vpop.f32.mrb[0].mxu0
      %v1345 = vpop.f32.mrb[0].mxu0
      %v1346 = vadd.f32 0.0, %v1345
      %v1347 = vpop.f32.mrb[0].mxu0
      %1348 = vmatprep.mubr.bf16.mxu0 0
      %1349 = vmatmul.mubr.bf16.gmra.mrb[0].mxu0 %v919
      %v1350 = vpop.f32.mrb[0].mxu0
      %v1351 = vadd.f32 0.0, %v1350
      %v1352 = vpop.f32.mrb[0].mxu0
      %v1353 = vpop.f32.mrb[0].mxu0
      %v1354 = vadd.f32 0.0, %v1353
      %v1355 = vpop.f32.mrb[0].mxu0
      %1356 = vmatprep.mubr.bf16.mxu0 0
      %1357 = vmatmul.mubr.bf16.gmra.mrb[0].mxu0 %v922
      %v1358 = vpop.f32.mrb[0].mxu0
      %v1359 = vadd.f32 0.0, %v1358
      %v1360 = vpop.f32.mrb[0].mxu0
      %v1361 = vpop.f32.mrb[0].mxu0
      %v1362 = vadd.f32 0.0, %v1361
      %v1363 = vpop.f32.mrb[0].mxu0
      %1364 = vmatprep.mubr.bf16.mxu0 0
      %1365 = vmatmul.mubr.bf16.gmra.mrb[0].mxu0 %v925
      %v1366 = vpop.f32.mrb[0].mxu0
      %v1367 = vadd.f32 0.0, %v1366
      %v1368 = vpop.f32.mrb[0].mxu0
      %v1369 = vpop.f32.mrb[0].mxu0
      %v1370 = vadd.f32 0.0, %v1369
      %v1371 = vpop.f32.mrb[0].mxu0
      %1372 = vmatprep.mubr.bf16.mxu0 0
      %1373 = vmatmul.mubr.bf16.gmra.mrb[0].mxu0 %v928
      %v1374 = vpop.f32.mrb[0].mxu0
      %v1375 = vadd.f32 0.0, %v1374
      %v1376 = vpop.f32.mrb[0].mxu0
      %v1377 = vpop.f32.mrb[0].mxu0
      %v1378 = vadd.f32 0.0, %v1377
      %v1379 = vpop.f32.mrb[0].mxu0
      %1380 = vmatprep.mubr.bf16.mxu0 0
      %1381 = vmatmul.mubr.bf16.gmra.mrb[0].mxu0 %v931
      %v1382 = vpop.f32.mrb[0].mxu0
      %v1383 = vadd.f32 0.0, %v1382
      %v1384 = vpop.f32.mrb[0].mxu0
      %v1385 = vpop.f32.mrb[0].mxu0
      %v1386 = vadd.f32 0.0, %v1385
      %v1387 = vpop.f32.mrb[0].mxu0
      %1388 = vmatprep.mubr.bf16.mxu0 0
      %1389 = vmatmul.mubr.bf16.gmra.mrb[0].mxu0 %v934
      %v1390 = vpop.f32.mrb[0].mxu0
      %v1391 = vadd.f32 0.0, %v1390
      %v1392 = vpop.f32.mrb[0].mxu0
      %v1393 = vpop.f32.mrb[0].mxu0
      %v1394 = vadd.f32 0.0, %v1393
      %v1395 = vpop.f32.mrb[0].mxu0
      %1396 = vmatprep.mubr.bf16.mxu0 0
      %1397 = vmatmul.mubr.bf16.gmra.mrb[0].mxu0 %v937
      %v1398 = vpop.f32.mrb[0].mxu0
      %v1399 = vadd.f32 0.0, %v1398
      %v1400 = vpop.f32.mrb[0].mxu0
      %v1401 = vpop.f32.mrb[0].mxu0
      %v1402 = vadd.f32 0.0, %v1401
      %v1403 = vpop.f32.mrb[0].mxu0
      %1404 = vmatprep.mubr.bf16.mxu0 0
      %1405 = vmatmul.mubr.bf16.gmra.mrb[0].mxu0 %v940
      %v1406 = vpop.f32.mrb[0].mxu0
      %v1407 = vadd.f32 0.0, %v1406
      %v1408 = vpop.f32.mrb[0].mxu0
      %v1409 = vpop.f32.mrb[0].mxu0
      %v1410 = vadd.f32 0.0, %v1409
      %v1411 = vpop.f32.mrb[0].mxu0
      %1412 = vmatprep.mubr.bf16.mxu0 0
      %1413 = vmatmul.mubr.bf16.gmra.mrb[0].mxu0 %v943
      %v1414 = vpop.f32.mrb[0].mxu0
      %v1415 = vadd.f32 0.0, %v1414
      %v1416 = vpop.f32.mrb[0].mxu0
      %v1417 = vpop.f32.mrb[0].mxu0
      %v1418 = vadd.f32 0.0, %v1417
      %v1419 = vpop.f32.mrb[0].mxu0
      %1420 = vmatprep.mubr.bf16.mxu0 0
      %1421 = vmatmul.mubr.bf16.gmra.mrb[0].mxu0 %v946
      %v1422 = vpop.f32.mrb[0].mxu0
      %v1423 = vadd.f32 0.0, %v1422
      %v1424 = vpop.f32.mrb[0].mxu0
      %v1425 = vpop.f32.mrb[0].mxu0
      %v1426 = vadd.f32 0.0, %v1425
      %v1427 = vpop.f32.mrb[0].mxu0
      %1428 = vmatprep.mubr.bf16.mxu0 0
      %1429 = vmatmul.mubr.bf16.gmra.mrb[0].mxu0 %v949
      %v1430 = vpop.f32.mrb[0].mxu0
      %v1431 = vadd.f32 0.0, %v1430
      %v1432 = vpop.f32.mrb[0].mxu0
      %v1433 = vpop.f32.mrb[0].mxu0
      %v1434 = vadd.f32 0.0, %v1433
      %v1435 = vpop.f32.mrb[0].mxu0
      %1436 = vmatprep.mubr.bf16.mxu0 0
      %1437 = vmatmul.mubr.bf16.gmra.mrb[0].mxu0 %v952
      %v1438 = vpop.f32.mrb[0].mxu0
      %v1439 = vadd.f32 0.0, %v1438
      %v1440 = vpop.f32.mrb[0].mxu0
      %v1441 = vpop.f32.mrb[0].mxu0
      %v1442 = vadd.f32 0.0, %v1441
      %v1443 = vpop.f32.mrb[0].mxu0
      %1444 = vmatprep.mubr.bf16.mxu0 0
      %1445 = vmatmul.mubr.bf16.gmra.mrb[0].mxu0 %v955
      %v1446 = vpop.f32.mrb[0].mxu0
      %v1447 = vadd.f32 0.0, %v1446
      %v1448 = vpop.f32.mrb[0].mxu0
      %v1449 = vpop.f32.mrb[0].mxu0
      %v1450 = vadd.f32 0.0, %v1449
      %v1451 = vpop.f32.mrb[0].mxu0
      %1452 = vmatprep.mubr.bf16.mxu0 0
      %1453 = vmatmul.mubr.bf16.gmra.mrb[0].mxu0 %v958
      %v1454 = vpop.f32.mrb[0].mxu0
      %v1455 = vadd.f32 0.0, %v1454
      %v1456 = vpop.f32.mrb[0].mxu0
      %v1457 = vpop.f32.mrb[0].mxu0
      %v1458 = vadd.f32 0.0, %v1457
      %v1459 = vpop.f32.mrb[0].mxu0
      %1460 = vmatprep.mubr.bf16.mxu0 0
      %1461 = vmatmul.mubr.bf16.gmra.mrb[0].mxu0 %v961
      %v1462 = vpop.f32.mrb[0].mxu0
      %v1463 = vadd.f32 0.0, %v1462
      %v1464 = vpop.f32.mrb[0].mxu0
      %v1465 = vpop.f32.mrb[0].mxu0
      %v1466 = vadd.f32 0.0, %v1465
      %v1467 = vpop.f32.mrb[0].mxu0
      %1468 = vmatprep.mubr.bf16.mxu0 0
      %1469 = vmatmul.mubr.bf16.gmra.mrb[0].mxu0 %v964
      %v1470 = vpop.f32.mrb[0].mxu0
      %v1471 = vadd.f32 0.0, %v1470
      %v1472 = vpop.f32.mrb[0].mxu0
      %v1473 = vpop.f32.mrb[0].mxu0
      %v1474 = vadd.f32 0.0, %v1473
      %v1475 = vpop.f32.mrb[0].mxu0
      %1476 = vmatprep.mubr.bf16.mxu0 0
      %1477 = vmatmul.mubr.bf16.gmra.mrb[0].mxu0 %v967
      %v1478 = vpop.f32.mrb[0].mxu0
      %v1479 = vadd.f32 0.0, %v1478
      %v1480 = vpop.f32.mrb[0].mxu0
      %v1481 = vpop.f32.mrb[0].mxu0
      %v1482 = vadd.f32 0.0, %v1481
      %v1483 = vpop.f32.mrb[0].mxu0
      %1484 = vmatprep.mubr.bf16.mxu0 0
      %1485 = vmatmul.mubr.bf16.gmra.mrb[0].mxu0 %v970
      %v1486 = vpop.f32.mrb[0].mxu0
      %v1487 = vadd.f32 0.0, %v1486
      %v1488 = vpop.f32.mrb[0].mxu0
      %v1489 = vpop.f32.mrb[0].mxu0
      %v1490 = vadd.f32 0.0, %v1489
      %v1491 = vpop.f32.mrb[0].mxu0
      %1492 = vmatprep.mubr.bf16.mxu0 0
      %1493 = vmatmul.mubr.bf16.gmra.mrb[0].mxu0 %v973
      %v1494 = vpop.f32.mrb[0].mxu0
      %v1495 = vadd.f32 0.0, %v1494
      %v1496 = vpop.f32.mrb[0].mxu0
      %v1497 = vpop.f32.mrb[0].mxu0
      %v1498 = vadd.f32 0.0, %v1497
      %v1499 = vpop.f32.mrb[0].mxu0
      %1500 = vmatprep.mubr.bf16.mxu0 0
      %1501 = vmatmul.mubr.bf16.gmra.mrb[0].mxu0 %v976
      %v1502 = vpop.f32.mrb[0].mxu0
      %v1503 = vadd.f32 0.0, %v1502
      %v1504 = vpop.f32.mrb[0].mxu0
      %v1505 = vpop.f32.mrb[0].mxu0
      %v1506 = vadd.f32 0.0, %v1505
      %v1507 = vpop.f32.mrb[0].mxu0
      %1508 = vmatprep.mubr.bf16.mxu0 0
      %1509 = vmatmul.mubr.bf16.gmra.mrb[0].mxu0 %v979
      %v1510 = vpop.f32.mrb[0].mxu0
      %v1511 = vadd.f32 0.0, %v1510
      %v1512 = vpop.f32.mrb[0].mxu0
      %v1513 = vpop.f32.mrb[0].mxu0
      %v1514 = vadd.f32 0.0, %v1513
      %v1515 = vpop.f32.mrb[0].mxu0
      %1516 = vmatprep.mubr.bf16.mxu0 0
      %1517 = vmatmul.mubr.bf16.gmra.mrb[0].mxu0 %v982
      %v1518 = vpop.f32.mrb[0].mxu0
      %v1519 = vadd.f32 0.0, %v1518
      %v1520 = vpop.f32.mrb[0].mxu0
      %v1521 = vpop.f32.mrb[0].mxu0
      %v1522 = vadd.f32 0.0, %v1521
      %v1523 = vpop.f32.mrb[0].mxu0
      %1524 = vmatprep.mubr.bf16.mxu0 0
      %1525 = vmatmul.mubr.bf16.gmra.mrb[0].mxu0 %v985
      %v1526 = vpop.f32.mrb[0].mxu0
      %v1527 = vadd.f32 0.0, %v1526
      %v1528 = vpop.f32.mrb[0].mxu0
      %v1529 = vpop.f32.mrb[0].mxu0
      %v1530 = vadd.f32 0.0, %v1529
      %v1531 = vpop.f32.mrb[0].mxu0
      %1532 = vmatprep.mubr.bf16.mxu0 0
      %1533 = vmatmul.mubr.bf16.gmra.mrb[0].mxu0 %v988
      %v1534 = vpop.f32.mrb[0].mxu0
      %v1535 = vadd.f32 0.0, %v1534
      %v1536 = vpop.f32.mrb[0].mxu0
      %v1537 = vpop.f32.mrb[0].mxu0
      %v1538 = vadd.f32 0.0, %v1537
      %v1539 = vpop.f32.mrb[0].mxu0
      %1540 = vmatprep.mubr.bf16.mxu0 0
      %1541 = vmatmul.mubr.bf16.gmra.mrb[0].mxu0 %v991
      %v1542 = vpop.f32.mrb[0].mxu0
      %v1543 = vadd.f32 0.0, %v1542
      %v1544 = vpop.f32.mrb[0].mxu0
      %v1545 = vpop.f32.mrb[0].mxu0
      %v1546 = vadd.f32 0.0, %v1545
      %v1547 = vpop.f32.mrb[0].mxu0
      %1548 = vmatprep.mubr.bf16.mxu0 0
      %1549 = vmatmul.mubr.bf16.gmra.mrb[0].mxu0 %v994
      %v1550 = vpop.f32.mrb[0].mxu0
      %v1551 = vadd.f32 0.0, %v1550
      %v1552 = vpop.f32.mrb[0].mxu0
      %v1553 = vpop.f32.mrb[0].mxu0
      %v1554 = vadd.f32 0.0, %v1553
      %v1555 = vpop.f32.mrb[0].mxu0
      %1556 = vmatprep.mubr.bf16.mxu0 0
      %1557 = vmatmul.mubr.bf16.gmra.mrb[0].mxu0 %v997
      %v1558 = vpop.f32.mrb[0].mxu0
      %v1559 = vadd.f32 0.0, %v1558
      %v1560 = vpop.f32.mrb[0].mxu0
      %v1561 = vpop.f32.mrb[0].mxu0
      %v1562 = vadd.f32 0.0, %v1561
      %v1563 = vpop.f32.mrb[0].mxu0
      %1564 = vmatprep.mubr.bf16.mxu0 0
      %1565 = vmatmul.mubr.bf16.gmra.mrb[0].mxu0 %v1000
      %v1566 = vpop.f32.mrb[0].mxu0
      %v1567 = vadd.f32 0.0, %v1566
      %v1568 = vpop.f32.mrb[0].mxu0
      %v1569 = vpop.f32.mrb[0].mxu0
      %v1570 = vadd.f32 0.0, %v1569
      %v1571 = vpop.f32.mrb[0].mxu0
      %1572 = vmatprep.mubr.bf16.mxu0 0
      %1573 = vmatmul.mubr.bf16.gmra.mrb[0].mxu0 %v1003
      %v1574 = vpop.f32.mrb[0].mxu0
      %v1575 = vadd.f32 0.0, %v1574
      %v1576 = vpop.f32.mrb[0].mxu0
      %v1577 = vpop.f32.mrb[0].mxu0
      %v1578 = vadd.f32 0.0, %v1577
      %v1579 = vpop.f32.mrb[0].mxu0
      %1580 = vmatprep.mubr.bf16.mxu0 0
      %1581 = vmatmul.mubr.bf16.gmra.mrb[0].mxu0 %v1006
      %v1582 = vpop.f32.mrb[0].mxu0
      %v1583 = vadd.f32 0.0, %v1582
      %v1584 = vpop.f32.mrb[0].mxu0
      %v1585 = vpop.f32.mrb[0].mxu0
      %v1586 = vadd.f32 0.0, %v1585
      %v1587 = vpop.f32.mrb[0].mxu0
      %1588 = vmatprep.mubr.bf16.mxu0 0
      %1589 = vmatmul.mubr.bf16.gmra.mrb[0].mxu0 %v1009
      %v1590 = vpop.f32.mrb[0].mxu0
      %v1591 = vadd.f32 0.0, %v1590
      %v1592 = vpop.f32.mrb[0].mxu0
      %v1593 = vpop.f32.mrb[0].mxu0
      %v1594 = vadd.f32 0.0, %v1593
      %v1595 = vpop.f32.mrb[0].mxu0
      %1596 = vdwg.mxu0
      %v1597 = vadd.f32 %v1046, %v1343
      %v1598 = vadd.f32 %v1049, %v1346
      %v1599 = vadd.f32 %v1054, %v1351
      %v1600 = vadd.f32 %v1057, %v1354
      %v1601 = vadd.f32 %v1062, %v1359
      %v1602 = vadd.f32 %v1065, %v1362
      %v1603 = vadd.f32 %v1070, %v1367
      %v1604 = vadd.f32 %v1073, %v1370
      %v1605 = vadd.f32 %v1078, %v1375
      %v1606 = vadd.f32 %v1081, %v1378
      %v1607 = vadd.f32 %v1086, %v1383
      %v1608 = vadd.f32 %v1089, %v1386
      %v1609 = vadd.f32 %v1094, %v1391
      %v1610 = vadd.f32 %v1097, %v1394
      %v1611 = vadd.f32 %v1102, %v1399
      %v1612 = vadd.f32 %v1105, %v1402
      %v1613 = vadd.f32 %v1110, %v1407
      %v1614 = vadd.f32 %v1113, %v1410
      %v1615 = vadd.f32 %v1118, %v1415
      %v1616 = vadd.f32 %v1121, %v1418
      %v1617 = vadd.f32 %v1126, %v1423
      %v1618 = vadd.f32 %v1129, %v1426
      %v1619 = vadd.f32 %v1134, %v1431
      %v1620 = vadd.f32 %v1137, %v1434
      %v1621 = vadd.f32 %v1142, %v1439
      %v1622 = vadd.f32 %v1145, %v1442
      %v1623 = vadd.f32 %v1150, %v1447
      %v1624 = vadd.f32 %v1153, %v1450
      %v1625 = vadd.f32 %v1158, %v1455
      %v1626 = vadd.f32 %v1161, %v1458
      %v1627 = vadd.f32 %v1166, %v1463
      %v1628 = vadd.f32 %v1169, %v1466
      %v1629 = vadd.f32 %v1174, %v1471
      %v1630 = vadd.f32 %v1177, %v1474
      %v1631 = vadd.f32 %v1182, %v1479
      %v1632 = vadd.f32 %v1185, %v1482
      %v1633 = vadd.f32 %v1190, %v1487
      %v1634 = vadd.f32 %v1193, %v1490
      %v1635 = vadd.f32 %v1198, %v1495
      %v1636 = vadd.f32 %v1201, %v1498
      %v1637 = vadd.f32 %v1206, %v1503
      %v1638 = vadd.f32 %v1209, %v1506
      %v1639 = vadd.f32 %v1214, %v1511
      %v1640 = vadd.f32 %v1217, %v1514
      %v1641 = vadd.f32 %v1222, %v1519
      %v1642 = vadd.f32 %v1225, %v1522
      %v1643 = vadd.f32 %v1230, %v1527
      %v1644 = vadd.f32 %v1233, %v1530
      %v1645 = vadd.f32 %v1238, %v1535
      %v1646 = vadd.f32 %v1241, %v1538
      %v1647 = vadd.f32 %v1246, %v1543
      %v1648 = vadd.f32 %v1249, %v1546
      %v1649 = vadd.f32 %v1254, %v1551
      %v1650 = vadd.f32 %v1257, %v1554
      %v1651 = vadd.f32 %v1262, %v1559
      %v1652 = vadd.f32 %v1265, %v1562
      %v1653 = vadd.f32 %v1270, %v1567
      %v1654 = vadd.f32 %v1273, %v1570
      %v1655 = vadd.f32 %v1278, %v1575
      %v1656 = vadd.f32 %v1281, %v1578
      %v1657 = vadd.f32 %v1286, %v1583
      %v1658 = vadd.f32 %v1289, %v1586
      %v1659 = vadd.f32 %v1294, %v1591
      %v1660 = vadd.f32 %v1297, %v1594
      %1661 = vst [vmem:[%s256] sm:$0xff] %v1597
      %1662 = vst [vmem:[%s256 + $0x8] sm:$0xff] %v1598
      %1663 = vst [vmem:[%s256 + $0x10] sm:$0xff] %v1599
      %1664 = vst [vmem:[%s256 + $0x18] sm:$0xff] %v1600
      %1665 = vst [vmem:[%s256 + $0x20] sm:$0xff] %v1601
      %1666 = vst [vmem:[%s256 + $0x28] sm:$0xff] %v1602
      %1667 = vst [vmem:[%s256 + $0x30] sm:$0xff] %v1603
      %1668 = vst [vmem:[%s256 + $0x38] sm:$0xff] %v1604
      %1669 = vst [vmem:[%s256 + $0x40] sm:$0xff] %v1605
      %1670 = vst [vmem:[%s256 + $0x48] sm:$0xff] %v1606
      %1671 = vst [vmem:[%s256 + $0x50] sm:$0xff] %v1607
      %1672 = vst [vmem:[%s256 + $0x58] sm:$0xff] %v1608
      %1673 = vst [vmem:[%s256 + $0x60] sm:$0xff] %v1609
      %1674 = vst [vmem:[%s256 + $0x68] sm:$0xff] %v1610
      %1675 = vst [vmem:[%s256 + $0x70] sm:$0xff] %v1611
      %1676 = vst [vmem:[%s256 + $0x78] sm:$0xff] %v1612
      %1677 = vst [vmem:[%s256 + $0x80] sm:$0xff] %v1613
      %1678 = vst [vmem:[%s256 + $0x88] sm:$0xff] %v1614
      %1679 = vst [vmem:[%s256 + $0x90] sm:$0xff] %v1615
      %1680 = vst [vmem:[%s256 + $0x98] sm:$0xff] %v1616
      %1681 = vst [vmem:[%s256 + $0xa0] sm:$0xff] %v1617
      %1682 = vst [vmem:[%s256 + $0xa8] sm:$0xff] %v1618
      %1683 = vst [vmem:[%s256 + $0xb0] sm:$0xff] %v1619
      %1684 = vst [vmem:[%s256 + $0xb8] sm:$0xff] %v1620
      %1685 = vst [vmem:[%s256 + $0xc0] sm:$0xff] %v1621
      %1686 = vst [vmem:[%s256 + $0xc8] sm:$0xff] %v1622
      %1687 = vst [vmem:[%s256 + $0xd0] sm:$0xff] %v1623
      %1688 = vst [vmem:[%s256 + $0xd8] sm:$0xff] %v1624
      %1689 = vst [vmem:[%s256 + $0xe0] sm:$0xff] %v1625
      %1690 = vst [vmem:[%s256 + $0xe8] sm:$0xff] %v1626
      %1691 = vst [vmem:[%s256 + $0xf0] sm:$0xff] %v1627
      %1692 = vst [vmem:[%s256 + $0xf8] sm:$0xff] %v1628
      %1693 = vst [vmem:[%s256 + $0x100] sm:$0xff] %v1629
      %1694 = vst [vmem:[%s256 + $0x108] sm:$0xff] %v1630
      %1695 = vst [vmem:[%s256 + $0x110] sm:$0xff] %v1631
      %1696 = vst [vmem:[%s256 + $0x118] sm:$0xff] %v1632
      %1697 = vst [vmem:[%s256 + $0x120] sm:$0xff] %v1633
      %1698 = vst [vmem:[%s256 + $0x128] sm:$0xff] %v1634
      %1699 = vst [vmem:[%s256 + $0x130] sm:$0xff] %v1635
      %1700 = vst [vmem:[%s256 + $0x138] sm:$0xff] %v1636
      %1701 = vst [vmem:[%s256 + $0x140] sm:$0xff] %v1637
      %1702 = vst [vmem:[%s256 + $0x148] sm:$0xff] %v1638
      %1703 = vst [vmem:[%s256 + $0x150] sm:$0xff] %v1639
      %1704 = vst [vmem:[%s256 + $0x158] sm:$0xff] %v1640
      %1705 = vst [vmem:[%s256 + $0x160] sm:$0xff] %v1641
      %1706 = vst [vmem:[%s256 + $0x168] sm:$0xff] %v1642
      %1707 = vst [vmem:[%s256 + $0x170] sm:$0xff] %v1643
      %1708 = vst [vmem:[%s256 + $0x178] sm:$0xff] %v1644
      %1709 = vst [vmem:[%s256 + $0x180] sm:$0xff] %v1645
      %1710 = vst [vmem:[%s256 + $0x188] sm:$0xff] %v1646
      %1711 = vst [vmem:[%s256 + $0x190] sm:$0xff] %v1647
      %1712 = vst [vmem:[%s256 + $0x198] sm:$0xff] %v1648
      %1713 = vst [vmem:[%s256 + $0x1a0] sm:$0xff] %v1649
      %1714 = vst [vmem:[%s256 + $0x1a8] sm:$0xff] %v1650
      %1715 = vst [vmem:[%s256 + $0x1b0] sm:$0xff] %v1651
      %1716 = vst [vmem:[%s256 + $0x1b8] sm:$0xff] %v1652
      %1717 = vst [vmem:[%s256 + $0x1c0] sm:$0xff] %v1653
      %1718 = vst [vmem:[%s256 + $0x1c8] sm:$0xff] %v1654
      %1719 = vst [vmem:[%s256 + $0x1d0] sm:$0xff] %v1655
      %1720 = vst [vmem:[%s256 + $0x1d8] sm:$0xff] %v1656
      %1721 = vst [vmem:[%s256 + $0x1e0] sm:$0xff] %v1657
      %1722 = vst [vmem:[%s256 + $0x1e8] sm:$0xff] %v1658
      %1723 = vst [vmem:[%s256 + $0x1f0] sm:$0xff] %v1659
      %1724 = vst [vmem:[%s256 + $0x1f8] sm:$0xff] %v1660
      %v1725 = vld [vmem:[%s250] sm:$0xff]
      %v1726 = vld [vmem:[%s250 + $0x8] sm:$0xff]
      %v1727 = vld [vmem:[%s250 + $0x10] sm:$0xff]
      %v1728 = vld [vmem:[%s250 + $0x18] sm:$0xff]
      %1729 = vmatprep.subr.mxu0 0.0
      %1730 = vmatpush1.msra.mxu0 %v1597
      %1731 = vmatprep.subr.mxu0 0.0
      %1732 = vmatpush1.msra.mxu0 %v1598
      %1733 = vmatprep.subr.mxu0 0.0
      %1734 = vmatpush1.msra.mxu0 %v1599
      %1735 = vmatprep.subr.mxu0 0.0
      %1736 = vmatpush1.msra.mxu0 %v1600
      %1737 = vmatprep.subr.mxu0 0.0
      %1738 = vmatpush1.msra.mxu0 %v1601
      %1739 = vmatprep.subr.mxu0 0.0
      %1740 = vmatpush1.msra.mxu0 %v1602
      %1741 = vmatprep.subr.mxu0 0.0
      %1742 = vmatpush1.msra.mxu0 %v1603
      %1743 = vmatprep.subr.mxu0 0.0
      %1744 = vmatpush1.msra.mxu0 %v1604
      %1745 = vmatprep.subr.mxu0 0.0
      %1746 = vmatpush1.msra.mxu0 %v1605
      %1747 = vmatprep.subr.mxu0 0.0
      %1748 = vmatpush1.msra.mxu0 %v1606
      %1749 = vmatprep.subr.mxu0 0.0
      %1750 = vmatpush1.msra.mxu0 %v1607
      %1751 = vmatprep.subr.mxu0 0.0
      %1752 = vmatpush1.msra.mxu0 %v1608
      %1753 = vmatprep.subr.mxu0 0.0
      %1754 = vmatpush1.msra.mxu0 %v1609
      %1755 = vmatprep.subr.mxu0 0.0
      %1756 = vmatpush1.msra.mxu0 %v1610
      %1757 = vmatprep.subr.mxu0 0.0
      %1758 = vmatpush1.msra.mxu0 %v1611
      %1759 = vmatprep.subr.mxu0 0.0
      %1760 = vmatpush1.msra.mxu0 %v1612
      %1761 = vmatprep.subr.mxu0 0.0
      %1762 = vmatpush1.msra.mxu0 %v1613
      %1763 = vmatprep.subr.mxu0 0.0
      %1764 = vmatpush1.msra.mxu0 %v1614
      %1765 = vmatprep.subr.mxu0 0.0
      %1766 = vmatpush1.msra.mxu0 %v1615
      %1767 = vmatprep.subr.mxu0 0.0
      %1768 = vmatpush1.msra.mxu0 %v1616
      %1769 = vmatprep.subr.mxu0 0.0
      %1770 = vmatpush1.msra.mxu0 %v1617
      %1771 = vmatprep.subr.mxu0 0.0
      %1772 = vmatpush1.msra.mxu0 %v1618
      %1773 = vmatprep.subr.mxu0 0.0
      %1774 = vmatpush1.msra.mxu0 %v1619
      %1775 = vmatprep.subr.mxu0 0.0
      %1776 = vmatpush1.msra.mxu0 %v1620
      %1777 = vmatprep.subr.mxu0 0.0
      %1778 = vmatpush1.msra.mxu0 %v1621
      %1779 = vmatprep.subr.mxu0 0.0
      %1780 = vmatpush1.msra.mxu0 %v1622
      %1781 = vmatprep.subr.mxu0 0.0
      %1782 = vmatpush1.msra.mxu0 %v1623
      %1783 = vmatprep.subr.mxu0 0.0
      %1784 = vmatpush1.msra.mxu0 %v1624
      %1785 = vmatprep.subr.mxu0 0.0
      %1786 = vmatpush1.msra.mxu0 %v1625
      %1787 = vmatprep.subr.mxu0 0.0
      %1788 = vmatpush1.msra.mxu0 %v1626
      %1789 = vmatprep.subr.mxu0 0.0
      %1790 = vmatpush1.msra.mxu0 %v1627
      %1791 = vmatprep.subr.mxu0 0.0
      %1792 = vmatpush1.msra.mxu0 %v1628
      %1793 = vmatprep.mubr.f32.mxu0 %v1726
      %1794 = vmatmul.mubr.f32.gmra.mrb[0].mxu0 %v1725
      %v1795 = vpop.f32.mrb[0].mxu0
      %v1796 = vadd.f32 0.0, %v1795
      %v1797 = vpop.f32.mrb[0].mxu0
      %1798 = vdwg.mxu0
      %1799 = vmatprep.subr.mxu0 0.0
      %1800 = vmatpush1.msra.mxu0 %v1629
      %1801 = vmatprep.subr.mxu0 0.0
      %1802 = vmatpush1.msra.mxu0 %v1630
      %1803 = vmatprep.subr.mxu0 0.0
      %1804 = vmatpush1.msra.mxu0 %v1631
      %1805 = vmatprep.subr.mxu0 0.0
      %1806 = vmatpush1.msra.mxu0 %v1632
      %1807 = vmatprep.subr.mxu0 0.0
      %1808 = vmatpush1.msra.mxu0 %v1633
      %1809 = vmatprep.subr.mxu0 0.0
      %1810 = vmatpush1.msra.mxu0 %v1634
      %1811 = vmatprep.subr.mxu0 0.0
      %1812 = vmatpush1.msra.mxu0 %v1635
      %1813 = vmatprep.subr.mxu0 0.0
      %1814 = vmatpush1.msra.mxu0 %v1636
      %1815 = vmatprep.subr.mxu0 0.0
      %1816 = vmatpush1.msra.mxu0 %v1637
      %1817 = vmatprep.subr.mxu0 0.0
      %1818 = vmatpush1.msra.mxu0 %v1638
      %1819 = vmatprep.subr.mxu0 0.0
      %1820 = vmatpush1.msra.mxu0 %v1639
      %1821 = vmatprep.subr.mxu0 0.0
      %1822 = vmatpush1.msra.mxu0 %v1640
      %1823 = vmatprep.subr.mxu0 0.0
      %1824 = vmatpush1.msra.mxu0 %v1641
      %1825 = vmatprep.subr.mxu0 0.0
      %1826 = vmatpush1.msra.mxu0 %v1642
      %1827 = vmatprep.subr.mxu0 0.0
      %1828 = vmatpush1.msra.mxu0 %v1643
      %1829 = vmatprep.subr.mxu0 0.0
      %1830 = vmatpush1.msra.mxu0 %v1644
      %1831 = vmatprep.subr.mxu0 0.0
      %1832 = vmatpush1.msra.mxu0 %v1645
      %1833 = vmatprep.subr.mxu0 0.0
      %1834 = vmatpush1.msra.mxu0 %v1646
      %1835 = vmatprep.subr.mxu0 0.0
      %1836 = vmatpush1.msra.mxu0 %v1647
      %1837 = vmatprep.subr.mxu0 0.0
      %1838 = vmatpush1.msra.mxu0 %v1648
      %1839 = vmatprep.subr.mxu0 0.0
      %1840 = vmatpush1.msra.mxu0 %v1649
      %1841 = vmatprep.subr.mxu0 0.0
      %1842 = vmatpush1.msra.mxu0 %v1650
      %1843 = vmatprep.subr.mxu0 0.0
      %1844 = vmatpush1.msra.mxu0 %v1651
      %1845 = vmatprep.subr.mxu0 0.0
      %1846 = vmatpush1.msra.mxu0 %v1652
      %1847 = vmatprep.subr.mxu0 0.0
      %1848 = vmatpush1.msra.mxu0 %v1653
      %1849 = vmatprep.subr.mxu0 0.0
      %1850 = vmatpush1.msra.mxu0 %v1654
      %1851 = vmatprep.subr.mxu0 0.0
      %1852 = vmatpush1.msra.mxu0 %v1655
      %1853 = vmatprep.subr.mxu0 0.0
      %1854 = vmatpush1.msra.mxu0 %v1656
      %1855 = vmatprep.subr.mxu0 0.0
      %1856 = vmatpush1.msra.mxu0 %v1657
      %1857 = vmatprep.subr.mxu0 0.0
      %1858 = vmatpush1.msra.mxu0 %v1658
      %1859 = vmatprep.subr.mxu0 0.0
      %1860 = vmatpush1.msra.mxu0 %v1659
      %1861 = vmatprep.subr.mxu0 0.0
      %1862 = vmatpush1.msra.mxu0 %v1660
      %1863 = vmatprep.mubr.f32.mxu0 %v1728
      %1864 = vmatmul.mubr.f32.gmra.mrb[0].mxu0 %v1727
      %v1865 = vpop.f32.mrb[0].mxu0
      %v1866 = vadd.f32 %v1796, %v1865
      %v1867 = vpop.f32.mrb[0].mxu0
      %1868 = vdwg.mxu0
      %1869 = vst [vmem:[%s262] sm:$0xff] %v1866
      %v1870 = vmul.f32 %v1597, %v1597
      %v1871 = vmul.f32 %v1598, %v1598
      %v1872 = vmul.f32 %v1599, %v1599
      %v1873 = vmul.f32 %v1600, %v1600
      %v1874 = vmul.f32 %v1601, %v1601
      %v1875 = vmul.f32 %v1602, %v1602
      %v1876 = vmul.f32 %v1603, %v1603
      %v1877 = vmul.f32 %v1604, %v1604
      %v1878 = vmul.f32 %v1605, %v1605
      %v1879 = vmul.f32 %v1606, %v1606
      %v1880 = vmul.f32 %v1607, %v1607
      %v1881 = vmul.f32 %v1608, %v1608
      %v1882 = vmul.f32 %v1609, %v1609
      %v1883 = vmul.f32 %v1610, %v1610
      %v1884 = vmul.f32 %v1611, %v1611
      %v1885 = vmul.f32 %v1612, %v1612
      %v1886 = vmul.f32 %v1613, %v1613
      %v1887 = vmul.f32 %v1614, %v1614
      %v1888 = vmul.f32 %v1615, %v1615
      %v1889 = vmul.f32 %v1616, %v1616
      %v1890 = vmul.f32 %v1617, %v1617
      %v1891 = vmul.f32 %v1618, %v1618
      %v1892 = vmul.f32 %v1619, %v1619
      %v1893 = vmul.f32 %v1620, %v1620
      %v1894 = vmul.f32 %v1621, %v1621
      %v1895 = vmul.f32 %v1622, %v1622
      %v1896 = vmul.f32 %v1623, %v1623
      %v1897 = vmul.f32 %v1624, %v1624
      %v1898 = vmul.f32 %v1625, %v1625
      %v1899 = vmul.f32 %v1626, %v1626
      %v1900 = vmul.f32 %v1627, %v1627
      %v1901 = vmul.f32 %v1628, %v1628
      %v1902 = vmul.f32 %v1629, %v1629
      %v1903 = vmul.f32 %v1630, %v1630
      %v1904 = vmul.f32 %v1631, %v1631
      %v1905 = vmul.f32 %v1632, %v1632
      %v1906 = vmul.f32 %v1633, %v1633
      %v1907 = vmul.f32 %v1634, %v1634
      %v1908 = vmul.f32 %v1635, %v1635
      %v1909 = vmul.f32 %v1636, %v1636
      %v1910 = vmul.f32 %v1637, %v1637
      %v1911 = vmul.f32 %v1638, %v1638
      %v1912 = vmul.f32 %v1639, %v1639
      %v1913 = vmul.f32 %v1640, %v1640
      %v1914 = vmul.f32 %v1641, %v1641
      %v1915 = vmul.f32 %v1642, %v1642
      %v1916 = vmul.f32 %v1643, %v1643
      %v1917 = vmul.f32 %v1644, %v1644
      %v1918 = vmul.f32 %v1645, %v1645
      %v1919 = vmul.f32 %v1646, %v1646
      %v1920 = vmul.f32 %v1647, %v1647
      %v1921 = vmul.f32 %v1648, %v1648
      %v1922 = vmul.f32 %v1649, %v1649
      %v1923 = vmul.f32 %v1650, %v1650
      %v1924 = vmul.f32 %v1651, %v1651
      %v1925 = vmul.f32 %v1652, %v1652
      %v1926 = vmul.f32 %v1653, %v1653
      %v1927 = vmul.f32 %v1654, %v1654
      %v1928 = vmul.f32 %v1655, %v1655
      %v1929 = vmul.f32 %v1656, %v1656
      %v1930 = vmul.f32 %v1657, %v1657
      %v1931 = vmul.f32 %v1658, %v1658
      %v1932 = vmul.f32 %v1659, %v1659
      %v1933 = vmul.f32 %v1660, %v1660
      %1934 = vmatprep.subr.mxu0 0.0
      %1935 = vmatpush1.msra.mxu0 %v1870
      %1936 = vmatprep.subr.mxu0 0.0
      %1937 = vmatpush1.msra.mxu0 %v1871
      %1938 = vmatprep.subr.mxu0 0.0
      %1939 = vmatpush1.msra.mxu0 %v1872
      %1940 = vmatprep.subr.mxu0 0.0
      %1941 = vmatpush1.msra.mxu0 %v1873
      %1942 = vmatprep.subr.mxu0 0.0
      %1943 = vmatpush1.msra.mxu0 %v1874
      %1944 = vmatprep.subr.mxu0 0.0
      %1945 = vmatpush1.msra.mxu0 %v1875
      %1946 = vmatprep.subr.mxu0 0.0
      %1947 = vmatpush1.msra.mxu0 %v1876
      %1948 = vmatprep.subr.mxu0 0.0
      %1949 = vmatpush1.msra.mxu0 %v1877
      %1950 = vmatprep.subr.mxu0 0.0
      %1951 = vmatpush1.msra.mxu0 %v1878
      %1952 = vmatprep.subr.mxu0 0.0
      %1953 = vmatpush1.msra.mxu0 %v1879
      %1954 = vmatprep.subr.mxu0 0.0
      %1955 = vmatpush1.msra.mxu0 %v1880
      %1956 = vmatprep.subr.mxu0 0.0
      %1957 = vmatpush1.msra.mxu0 %v1881
      %1958 = vmatprep.subr.mxu0 0.0
      %1959 = vmatpush1.msra.mxu0 %v1882
      %1960 = vmatprep.subr.mxu0 0.0
      %1961 = vmatpush1.msra.mxu0 %v1883
      %1962 = vmatprep.subr.mxu0 0.0
      %1963 = vmatpush1.msra.mxu0 %v1884
      %1964 = vmatprep.subr.mxu0 0.0
      %1965 = vmatpush1.msra.mxu0 %v1885
      %1966 = vmatprep.subr.mxu0 0.0
      %1967 = vmatpush1.msra.mxu0 %v1886
      %1968 = vmatprep.subr.mxu0 0.0
      %1969 = vmatpush1.msra.mxu0 %v1887
      %1970 = vmatprep.subr.mxu0 0.0
      %1971 = vmatpush1.msra.mxu0 %v1888
      %1972 = vmatprep.subr.mxu0 0.0
      %1973 = vmatpush1.msra.mxu0 %v1889
      %1974 = vmatprep.subr.mxu0 0.0
      %1975 = vmatpush1.msra.mxu0 %v1890
      %1976 = vmatprep.subr.mxu0 0.0
      %1977 = vmatpush1.msra.mxu0 %v1891
      %1978 = vmatprep.subr.mxu0 0.0
      %1979 = vmatpush1.msra.mxu0 %v1892
      %1980 = vmatprep.subr.mxu0 0.0
      %1981 = vmatpush1.msra.mxu0 %v1893
      %1982 = vmatprep.subr.mxu0 0.0
      %1983 = vmatpush1.msra.mxu0 %v1894
      %1984 = vmatprep.subr.mxu0 0.0
      %1985 = vmatpush1.msra.mxu0 %v1895
      %1986 = vmatprep.subr.mxu0 0.0
      %1987 = vmatpush1.msra.mxu0 %v1896
      %1988 = vmatprep.subr.mxu0 0.0
      %1989 = vmatpush1.msra.mxu0 %v1897
      %1990 = vmatprep.subr.mxu0 0.0
      %1991 = vmatpush1.msra.mxu0 %v1898
      %1992 = vmatprep.subr.mxu0 0.0
      %1993 = vmatpush1.msra.mxu0 %v1899
      %1994 = vmatprep.subr.mxu0 0.0
      %1995 = vmatpush1.msra.mxu0 %v1900
      %1996 = vmatprep.subr.mxu0 0.0
      %1997 = vmatpush1.msra.mxu0 %v1901
      %1998 = vmatprep.mubr.f32.mxu0 %v1726
      %1999 = vmatmul.mubr.f32.gmra.mrb[0].mxu0 %v1725
      %v2000 = vpop.f32.mrb[0].mxu0
      %v2001 = vadd.f32 0.0, %v2000
      %v2002 = vpop.f32.mrb[0].mxu0
      %2003 = vdwg.mxu0
      %2004 = vmatprep.subr.mxu0 0.0
      %2005 = vmatpush1.msra.mxu0 %v1902
      %2006 = vmatprep.subr.mxu0 0.0
      %2007 = vmatpush1.msra.mxu0 %v1903
      %2008 = vmatprep.subr.mxu0 0.0
      %2009 = vmatpush1.msra.mxu0 %v1904
      %2010 = vmatprep.subr.mxu0 0.0
      %2011 = vmatpush1.msra.mxu0 %v1905
      %2012 = vmatprep.subr.mxu0 0.0
      %2013 = vmatpush1.msra.mxu0 %v1906
      %2014 = vmatprep.subr.mxu0 0.0
      %2015 = vmatpush1.msra.mxu0 %v1907
      %2016 = vmatprep.subr.mxu0 0.0
      %2017 = vmatpush1.msra.mxu0 %v1908
      %2018 = vmatprep.subr.mxu0 0.0
      %2019 = vmatpush1.msra.mxu0 %v1909
      %2020 = vmatprep.subr.mxu0 0.0
      %2021 = vmatpush1.msra.mxu0 %v1910
      %2022 = vmatprep.subr.mxu0 0.0
      %2023 = vmatpush1.msra.mxu0 %v1911
      %2024 = vmatprep.subr.mxu0 0.0
      %2025 = vmatpush1.msra.mxu0 %v1912
      %2026 = vmatprep.subr.mxu0 0.0
      %2027 = vmatpush1.msra.mxu0 %v1913
      %2028 = vmatprep.subr.mxu0 0.0
      %2029 = vmatpush1.msra.mxu0 %v1914
      %2030 = vmatprep.subr.mxu0 0.0
      %2031 = vmatpush1.msra.mxu0 %v1915
      %2032 = vmatprep.subr.mxu0 0.0
      %2033 = vmatpush1.msra.mxu0 %v1916
      %2034 = vmatprep.subr.mxu0 0.0
      %2035 = vmatpush1.msra.mxu0 %v1917
      %2036 = vmatprep.subr.mxu0 0.0
      %2037 = vmatpush1.msra.mxu0 %v1918
      %2038 = vmatprep.subr.mxu0 0.0
      %2039 = vmatpush1.msra.mxu0 %v1919
      %2040 = vmatprep.subr.mxu0 0.0
      %2041 = vmatpush1.msra.mxu0 %v1920
      %2042 = vmatprep.subr.mxu0 0.0
      %2043 = vmatpush1.msra.mxu0 %v1921
      %2044 = vmatprep.subr.mxu0 0.0
      %2045 = vmatpush1.msra.mxu0 %v1922
      %2046 = vmatprep.subr.mxu0 0.0
      %2047 = vmatpush1.msra.mxu0 %v1923
      %2048 = vmatprep.subr.mxu0 0.0
      %2049 = vmatpush1.msra.mxu0 %v1924
      %2050 = vmatprep.subr.mxu0 0.0
      %2051 = vmatpush1.msra.mxu0 %v1925
      %2052 = vmatprep.subr.mxu0 0.0
      %2053 = vmatpush1.msra.mxu0 %v1926
      %2054 = vmatprep.subr.mxu0 0.0
      %2055 = vmatpush1.msra.mxu0 %v1927
      %2056 = vmatprep.subr.mxu0 0.0
      %2057 = vmatpush1.msra.mxu0 %v1928
      %2058 = vmatprep.subr.mxu0 0.0
      %2059 = vmatpush1.msra.mxu0 %v1929
      %2060 = vmatprep.subr.mxu0 0.0
      %2061 = vmatpush1.msra.mxu0 %v1930
      %2062 = vmatprep.subr.mxu0 0.0
      %2063 = vmatpush1.msra.mxu0 %v1931
      %2064 = vmatprep.subr.mxu0 0.0
      %2065 = vmatpush1.msra.mxu0 %v1932
      %2066 = vmatprep.subr.mxu0 0.0
      %2067 = vmatpush1.msra.mxu0 %v1933
      %2068 = vmatprep.mubr.f32.mxu0 %v1728
      %2069 = vmatmul.mubr.f32.gmra.mrb[0].mxu0 %v1727
      %v2070 = vpop.f32.mrb[0].mxu0
      %v2071 = vadd.f32 %v2001, %v2070
      %v2072 = vpop.f32.mrb[0].mxu0
      %2073 = vdwg.mxu0
      %2074 = vst [vmem:[%s262 + $0x8] sm:$0xff] %v2071
      %s2075 = smul.u32 64, %s17
      %p2076 = scmp.lt.s32.totalorder %s2075, 127
      %s2077 = scalar_select %p2076, %s2075, 127
      %s2078 = smul.addr %s2077, 8
      %s2079 = scalar_lea.vmem %s4, %s2078
      %s2080 = smul.u32 2, %s17
      %p2081 = scmp.lt.s32.totalorder %s2080, 3
      %s2082 = scalar_select %p2081, %s2080, 3
      %s2083 = smul.addr %s2082, 8
      %s2084 = scalar_lea.vmem %s5, %s2083
      // Predicated region
      $region37: #{up_conv_forward.2} parent=35 // pred_check
        %p2085 = pneg %p129
      $region38: #{up_conv_forward.2} parent=35 // pred_check_branch
        %2087 = sbr.rel (%p2085) target = $region40
      $region39: #{up_conv_forward.2} parent=35 // pred_region
        %s2088 = smul.u32 64, %s17
      $region40: #{up_conv_forward.2} parent=35 // pred_fallthru
        _
      // Predicated region
      $region41: #{up_conv_forward.2} parent=35 // pred_check
        %p2089 = pneg %p155
      $region42: #{up_conv_forward.2} parent=35 // pred_check_branch
        %2091 = sbr.rel (%p2089) target = $region44
      $region43: #{up_conv_forward.2} parent=35 // pred_region
        %s2092 = smul.u32 2, %s17
      $region44: #{up_conv_forward.2} parent=35 // pred_fallthru
        _
    $region36: #{up_conv_forward.2} parent=5 // pred_fallthru
      _
    %p2093 = scmp.le.s32.totalorder 2, %s12
    // Predicated region
    $region45: #{up_conv_forward.2} parent=5 // pred_check
      %p2094 = pneg %p2093
    $region46: #{up_conv_forward.2} parent=5 // pred_check_branch
      %2096 = sbr.rel (%p2094) target = $region48
    $region47: #{up_conv_forward.2} parent=5 // pred_region
      %s2097 = ssub.s32 %s12, 2
      // Predicated region
      $region49: #{up_conv_forward.2} parent=47 // pred_check
        %p2098 = pneg %p135
      $region50: #{up_conv_forward.2} parent=47 // pred_check_branch
        %2100 = sbr.rel (%p2098) target = $region52
      $region51: #{up_conv_forward.2} parent=47 // pred_region
        %s2101 = smul.u32 64, %s18
        %p2102 = scmp.lt.s32.totalorder %s2101, 127
        %s2103 = scalar_select %p2102, %s2101, 127
        %s2104 = smul.addr %s2103, 8
        %s2105 = scalar_lea.vmem %s4, %s2104
      $region52: #{up_conv_forward.2} parent=47 // pred_fallthru
        _
      // Predicated region
      $region53: #{up_conv_forward.2} parent=47 // pred_check
        %p2106 = pneg %p161
      $region54: #{up_conv_forward.2} parent=47 // pred_check_branch
        %2108 = sbr.rel (%p2106) target = $region56
      $region55: #{up_conv_forward.2} parent=47 // pred_region
        %s2109 = smul.u32 2, %s18
        %p2110 = scmp.lt.s32.totalorder %s2109, 3
        %s2111 = scalar_select %p2110, %s2109, 3
        %s2112 = smul.addr %s2111, 8
        %s2113 = scalar_lea.vmem %s5, %s2112
      $region56: #{up_conv_forward.2} parent=47 // pred_fallthru
        _
    $region48: #{up_conv_forward.2} parent=5 // pred_fallthru
      _
  $region6: #{up_conv_forward.2} parent=0 // loop_footer
    %s16 = sadd.s32 1, %s12
  $region7: #{up_conv_forward.2} parent=0 // loop_footer_branch
    %11 = sbr.rel target = $region3
  $region8: #{up_conv_forward.2} parent=0 // loop_exit
    _

</llo_original>
